<compile_context>
chip_gen: v6e
topology: v6e:2x2x1
jax: 0.10.0
libtpu: 0.0.40
codegen_flags: <defaults>
</compile_context>

<pallas_src>
import math
import functools

import jax
import jax.numpy as jnp
from jax.experimental import pallas as pl
from jax.experimental.pallas import tpu as pltpu


_LN_EPS = 1e-5
_HEAD_PAD = 128                      # lane-dense padding for the (D, 1) fc head
_VMEM_LIMIT = 32 * 1024 * 1024       # fits the default scoped limit on v5e/v6e/v7x


def _compiler_params(n_axes=1):
    return pltpu.CompilerParams(
        dimension_semantics=("parallel",) * n_axes,
        vmem_limit_bytes=_VMEM_LIMIT,
    )


def _pick_block_m(m, target=256):
    """Largest 128/8-aligned row tile dividing M (whole slab at toy sizes)."""
    for bm in (target, 128, 64, 32, 16, 8):
        if bm <= m and m % bm == 0:
            return bm
    return m


# ----------------------------- Pallas kernels ------------------------------

def _inproj_pe_kernel(x_ref, w_ref, b_ref, pe_ref, o_ref):
    # input projection + bias + positional-encoding add, one pass over the slab
    y = jnp.dot(x_ref[...].astype(jnp.bfloat16), w_ref[...],
                preferred_element_type=jnp.float32)
    o_ref[...] = (y + b_ref[...] + pe_ref[...]).astype(o_ref.dtype)


def input_projection_pe(x2d, w_bf16, b, pe2d):
    M, F = x2d.shape
    D = w_bf16.shape[1]
    bm = _pick_block_m(M)
    return pl.pallas_call(
        _inproj_pe_kernel,
        grid=(M // bm,),
        in_specs=[
            pl.BlockSpec((bm, F), lambda i: (i, 0)),
            pl.BlockSpec((F, D), lambda i: (0, 0)),
            pl.BlockSpec((1, D), lambda i: (0, 0)),
            pl.BlockSpec((bm, D), lambda i: (i, 0)),
        ],
        out_specs=pl.BlockSpec((bm, D), lambda i: (i, 0)),
        out_shape=jax.ShapeDtypeStruct((M, D), jnp.float32),
        compiler_params=_compiler_params(),
    )(x2d, w_bf16, b, pe2d)


def _matmul_bias_kernel(x_ref, w_ref, b_ref, o_ref):
    y = jnp.dot(x_ref[...].astype(jnp.bfloat16), w_ref[...],
                preferred_element_type=jnp.float32)
    o_ref[...] = (y + b_ref[...]).astype(o_ref.dtype)


def matmul_bias(x2d, w_bf16, b):
    """Used for the fused QKV projection and the (lane-padded) fc head."""
    M, K = x2d.shape
    N = w_bf16.shape[1]
    bm = _pick_block_m(M)
    return pl.pallas_call(
        _matmul_bias_kernel,
        grid=(M // bm,),
        in_specs=[
            pl.BlockSpec((bm, K), lambda i: (i, 0)),
            pl.BlockSpec((K, N), lambda i: (0, 0)),
            pl.BlockSpec((1, N), lambda i: (0, 0)),
        ],
        out_specs=pl.BlockSpec((bm, N), lambda i: (i, 0)),
        out_shape=jax.ShapeDtypeStruct((M, N), jnp.float32),
        compiler_params=_compiler_params(),
    )(x2d, w_bf16, b)


def _mha_kernel(qkv_ref, o_ref, *, num_heads, d_model, scale):
    # All heads of one batch element per program: the head split is done with
    # static lane slices inside the kernel (no JAX-level reshape/transpose and
    # no extra HBM round trips of Q/K/V/O).
    dh = d_model // num_heads
    qkv = qkv_ref[0]                                      # (S, 3D) f32
    outs = []
    for h in range(num_heads):
        q = qkv[:, h * dh:(h + 1) * dh].astype(jnp.bfloat16)
        k = qkv[:, d_model + h * dh:d_model + (h + 1) * dh].astype(jnp.bfloat16)
        v = qkv[:, 2 * d_model + h * dh:2 * d_model + (h + 1) * dh].astype(jnp.bfloat16)
        # q @ k^T with the transpose consumed by the MXU (no explicit k.T).
        s = jax.lax.dot_general(q, k, (((1,), (1,)), ((), ())),
                                preferred_element_type=jnp.float32) * scale
        s = s - jnp.max(s, axis=-1, keepdims=True)
        p = jnp.exp(s)
        p = p * pl.reciprocal(jnp.sum(p, axis=-1, keepdims=True), approx=True)
        outs.append(jnp.dot(p.astype(jnp.bfloat16), v,
                            preferred_element_type=jnp.float32))
    # lane-dense (S, D) write
    o_ref[0] = jnp.concatenate(outs, axis=-1).astype(o_ref.dtype)
    # NOTE: full (S, S) scores per head; fine for max_seq_length ~500 of this
    # model. For S >~ 2k convert to a flash-style online softmax over KV tiles.


def multi_head_attention(qkv, num_heads):
    B, S, threeD = qkv.shape
    D = threeD // 3
    kernel = functools.partial(_mha_kernel, num_heads=num_heads, d_model=D,
                               scale=1.0 / math.sqrt(D // num_heads))
    return pl.pallas_call(
        kernel,
        grid=(B,),
        in_specs=[pl.BlockSpec((1, S, threeD), lambda b: (b, 0, 0))],
        out_specs=pl.BlockSpec((1, S, D), lambda b: (b, 0, 0)),
        out_shape=jax.ShapeDtypeStruct((B, S, D), jnp.float32),
        compiler_params=_compiler_params(),
    )(qkv)


def _proj_res_ln_kernel(ctx_ref, w_ref, b_ref, res_ref, g_ref, bb_ref, o_ref):
    # Wo projection + residual add + LayerNorm1, fused epilogue (f32 stats).
    y = jnp.dot(ctx_ref[...].astype(jnp.bfloat16), w_ref[...],
                preferred_element_type=jnp.float32)
    y = y + b_ref[...] + res_ref[...]
    mu = jnp.mean(y, axis=-1, keepdims=True)
    var = jnp.mean(jnp.square(y - mu), axis=-1, keepdims=True)
    y = (y - mu) * jax.lax.rsqrt(var + _LN_EPS)
    o_ref[...] = (y * g_ref[...] + bb_ref[...]).astype(o_ref.dtype)


def proj_residual_layernorm(ctx2d, w_bf16, b, res2d, gamma, beta):
    M, D = ctx2d.shape
    N = w_bf16.shape[1]
    bm = _pick_block_m(M)
    return pl.pallas_call(
        _proj_res_ln_kernel,
        grid=(M // bm,),
        in_specs=[
            pl.BlockSpec((bm, D), lambda i: (i, 0)),
            pl.BlockSpec((D, N), lambda i: (0, 0)),
            pl.BlockSpec((1, N), lambda i: (0, 0)),
            pl.BlockSpec((bm, N), lambda i: (i, 0)),
            pl.BlockSpec((1, N), lambda i: (0, 0)),
            pl.BlockSpec((1, N), lambda i: (0, 0)),
        ],
        out_specs=pl.BlockSpec((bm, N), lambda i: (i, 0)),
        out_shape=jax.ShapeDtypeStruct((M, N), jnp.float32),
        compiler_params=_compiler_params(),
    )(ctx2d, w_bf16, b, res2d, gamma, beta)


def _ffn_res_ln_kernel(x_ref, w1_ref, b1_ref, w2_ref, b2_ref, g_ref, bb_ref, o_ref):
    # w1 + ReLU + w2 + residual + LayerNorm2 fused; the FFN hidden stays in VMEM.
    x = x_ref[...]
    h = jnp.dot(x.astype(jnp.bfloat16), w1_ref[...],
                preferred_element_type=jnp.float32)
    h = jnp.maximum(h + b1_ref[...], 0.0)
    y = jnp.dot(h.astype(jnp.bfloat16), w2_ref[...],
                preferred_element_type=jnp.float32)
    y = y + b2_ref[...] + x
    mu = jnp.mean(y, axis=-1, keepdims=True)
    var = jnp.mean(jnp.square(y - mu), axis=-1, keepdims=True)
    y = (y - mu) * jax.lax.rsqrt(var + _LN_EPS)
    o_ref[...] = (y * g_ref[...] + bb_ref[...]).astype(o_ref.dtype)


def ffn_residual_layernorm(x2d, w1, b1, w2, b2, gamma, beta):
    M, D = x2d.shape
    FF = w1.shape[1]
    bm = _pick_block_m(M)
    return pl.pallas_call(
        _ffn_res_ln_kernel,
        grid=(M // bm,),
        in_specs=[
            pl.BlockSpec((bm, D), lambda i: (i, 0)),
            pl.BlockSpec((D, FF), lambda i: (0, 0)),
            pl.BlockSpec((1, FF), lambda i: (0, 0)),
            pl.BlockSpec((FF, D), lambda i: (0, 0)),
            pl.BlockSpec((1, D), lambda i: (0, 0)),
            pl.BlockSpec((1, D), lambda i: (0, 0)),
            pl.BlockSpec((1, D), lambda i: (0, 0)),
        ],
        out_specs=pl.BlockSpec((bm, D), lambda i: (i, 0)),
        out_shape=jax.ShapeDtypeStruct((M, D), jnp.float32),
        compiler_params=_compiler_params(),
    )(x2d, w1, b1, w2, b2, gamma, beta)


# ---------------------------- model definition -----------------------------

def make_positional_encoding(max_seq_length, d_model):
    pos = jnp.arange(max_seq_length, dtype=jnp.float32)[:, None]
    div = jnp.exp(
        jnp.arange(0, d_model, 2, dtype=jnp.float32) * (-math.log(10000.0) / d_model)
    )
    pe = jnp.zeros((max_seq_length, d_model), jnp.float32)
    pe = pe.at[:, 0::2].set(jnp.sin(pos * div))
    pe = pe.at[:, 1::2].set(jnp.cos(pos * div))
    return pe  # (max_seq_length, d_model)


def init_params(key, input_size, d_model, num_heads, num_layers, dim_feedforward,
                max_seq_length):
    def dense(k, fan_in, fan_out):
        kw, kb = jax.random.split(k)
        w = jax.random.normal(kw, (fan_in, fan_out), jnp.float32) * 0.05
        b = jax.random.normal(kb, (1, fan_out), jnp.float32) * 0.01
        return w, b

    keys = jax.random.split(key, 2 + num_layers)
    in_w, in_b = dense(keys[0], input_size, d_model)
    fc_w, fc_b = dense(keys[1], d_model, 1)

    layers = []
    for li in range(num_layers):
        lk = jax.random.split(keys[2 + li], 6)
        wq, bq = dense(lk[0], d_model, d_model)
        wk, bk = dense(lk[1], d_model, d_model)
        wv, bv = dense(lk[2], d_model, d_model)
        wo, bo = dense(lk[3], d_model, d_model)
        w1, b1 = dense(lk[4], d_model, dim_feedforward)
        w2, b2 = dense(lk[5], dim_feedforward, d_model)
        layers.append(dict(
            wq=wq, bq=bq, wk=wk, bk=bk, wv=wv, bv=bv, wo=wo, bo=bo,
            w1=w1, b1=b1, w2=w2, b2=b2,
            ln1_g=jnp.ones((1, d_model), jnp.float32),
            ln1_b=jnp.zeros((1, d_model), jnp.float32),
            ln2_g=jnp.ones((1, d_model), jnp.float32),
            ln2_b=jnp.zeros((1, d_model), jnp.float32),
        ))

    return dict(
        in_w=in_w, in_b=in_b,
        pe=make_positional_encoding(max_seq_length, d_model),
        layers=layers,
        fc_w=fc_w, fc_b=fc_b,
    )


def prepare_params(params):
    """One-time packing: bf16 MXU weights (f32 accumulate in-kernel), fused QKV
    weight, lane-padded fc head. Biases / LN params stay f32."""
    prepped = dict(
        in_w=params["in_w"].astype(jnp.bfloat16),
        in_b=params["in_b"],
        pe=params["pe"],
        fc_w=jnp.pad(params["fc_w"], ((0, 0), (0, _HEAD_PAD - 1))).astype(jnp.bfloat16),
        fc_b=jnp.pad(params["fc_b"], ((0, 0), (0, _HEAD_PAD - 1))),
        layers=[],
    )
    for p in params["layers"]:
        prepped["layers"].append(dict(
            wqkv=jnp.concatenate([p["wq"], p["wk"], p["wv"]], axis=1).astype(jnp.bfloat16),
            bqkv=jnp.concatenate([p["bq"], p["bk"], p["bv"]], axis=1),
            wo=p["wo"].astype(jnp.bfloat16), bo=p["bo"],
            w1=p["w1"].astype(jnp.bfloat16), b1=p["b1"],
            w2=p["w2"].astype(jnp.bfloat16), b2=p["b2"],
            ln1_g=p["ln1_g"], ln1_b=p["ln1_b"],
            ln2_g=p["ln2_g"], ln2_b=p["ln2_b"],
        ))
    return prepped


def encoder_layer_forward(p, x2d, B, S, D, num_heads):
    """Post-norm nn.TransformerEncoderLayer (ReLU activation), batch_first."""
    qkv = matmul_bias(x2d, p["wqkv"], p["bqkv"])                    # (M, 3D)
    ctx = multi_head_attention(qkv.reshape(B, S, 3 * D), num_heads)  # (B, S, D)
    ctx2d = ctx.reshape(B * S, D)
    # Wo projection + residual (dropout = no-op) + LayerNorm1
    x2d = proj_residual_layernorm(ctx2d, p["wo"], p["bo"], x2d,
                                  p["ln1_g"], p["ln1_b"])
    # FFN + residual + LayerNorm2
    x2d = ffn_residual_layernorm(x2d, p["w1"], p["b1"], p["w2"], p["b2"],
                                 p["ln2_g"], p["ln2_b"])
    return x2d


@functools.partial(jax.jit, static_argnames=("num_heads",))
def transformer_forward(params, x, *, num_heads):
    """x: (B, S, input_size) -> (B, 1)."""
    B, S, F = x.shape
    D = params["in_w"].shape[1]

    # positional-encoding slab matching the (B*S, D) row layout (built once)
    pe2d = jnp.broadcast_to(params["pe"][:S, :], (B, S, D)).reshape(B * S, D)

    # fused input projection + PE add (dropout eval no-op)
    h = input_projection_pe(x.reshape(B * S, F), params["in_w"], params["in_b"], pe2d)

    # encoder stack
    for layer in params["layers"]:
        h = encoder_layer_forward(layer, h, B, S, D, num_heads)

    # regression head on last timestep; lane-padded output, slice back to (B, 1)
    last = h.reshape(B, S, D)[:, -1, :]                       # (B, D)
    out = matmul_bias(last, params["fc_w"], params["fc_b"])   # (B, 128) lane-dense
    return out[:, :1]


# --------------------------------- driver -----------------------------------

if __name__ == "__main__":
    # small shapes consistent with the module's forward
    B, S = 2, 8
    INPUT_SIZE = 4
    D_MODEL = 32
    NUM_HEADS = 4
    NUM_LAYERS = 2
    DIM_FF = 64
    MAX_SEQ = 64

    key = jax.random.PRNGKey(0)
    k_par, k_x = jax.random.split(key)
    raw = init_params(k_par, INPUT_SIZE, D_MODEL, NUM_HEADS, NUM_LAYERS,
                      DIM_FF, MAX_SEQ)
    params = prepare_params(raw)
    x = jax.random.normal(k_x, (B, S, INPUT_SIZE), jnp.float32)

    out = transformer_forward(params, x, num_heads=NUM_HEADS)
    jax.block_until_ready(out)
    assert out.shape == (B, 1), out.shape
    print("KERNEL_OK")
</pallas_src>

<mosaic_0001>
module attributes {stable_mosaic.version = 11 : i64} {
  func.func @_inproj_pe_kernel(%arg0: i32, %arg1: memref<16x4xf32, #tpu.memory_space<vmem>>, %arg2: memref<4x32xbf16, #tpu.memory_space<vmem>>, %arg3: memref<1x32xf32, #tpu.memory_space<vmem>>, %arg4: memref<16x32xf32, #tpu.memory_space<vmem>>, %arg5: memref<16x32xf32, #tpu.memory_space<vmem>>) attributes {dimension_semantics = [#tpu.dimension_semantics<parallel>], iteration_bounds = array<i64: 1>, scalar_prefetch = 0 : i64, scratch_operands = 0 : i64, tpu.core_type = #tpu.core_type<tc>, window_params = [{transform_indices = @transform_0, window_bounds = array<i64: 16, 4>}, {pipeline_mode = #tpu.pipeline_mode<synchronous>, transform_indices = @transform_1, window_bounds = array<i64: 4, 32>}, {pipeline_mode = #tpu.pipeline_mode<synchronous>, transform_indices = @transform_2, window_bounds = array<i64: 1, 32>}, {transform_indices = @transform_3, window_bounds = array<i64: 16, 32>}, {transform_indices = @transform_4, window_bounds = array<i64: 16, 32>}]} {
    %c0 = arith.constant 0 : index
    %c0_0 = arith.constant 0 : index
    %0 = vector.load %arg1[%c0, %c0_0] : memref<16x4xf32, #tpu.memory_space<vmem>>, vector<16x4xf32>
    %1 = arith.truncf %0 : vector<16x4xf32> to vector<16x4xbf16>
    %c0_1 = arith.constant 0 : index
    %c0_2 = arith.constant 0 : index
    %2 = vector.load %arg2[%c0_1, %c0_2] : memref<4x32xbf16, #tpu.memory_space<vmem>>, vector<4x32xbf16>
    %cst = arith.constant dense<0.000000e+00> : vector<16x32xf32>
    %3 = tpu.matmul %1, %2, %cst {dimension_numbers = #tpu.dot_dimension_numbers<[1], [0], [0], [1], [0, 0, 1, 1], [], []>} : vector<16x4xbf16>, vector<4x32xbf16>, vector<16x32xf32> -> vector<16x32xf32>
    %c0_3 = arith.constant 0 : index
    %c0_4 = arith.constant 0 : index
    %4 = vector.load %arg3[%c0_3, %c0_4] : memref<1x32xf32, #tpu.memory_space<vmem>>, vector<1x32xf32>
    %5 = vector.broadcast %4 : vector<1x32xf32> to vector<16x32xf32>
    %6 = arith.addf %3, %5 : vector<16x32xf32>
    %c0_5 = arith.constant 0 : index
    %c0_6 = arith.constant 0 : index
    %7 = vector.load %arg4[%c0_5, %c0_6] : memref<16x32xf32, #tpu.memory_space<vmem>>, vector<16x32xf32>
    %8 = arith.addf %6, %7 : vector<16x32xf32>
    %c0_7 = arith.constant 0 : index
    %c0_8 = arith.constant 0 : index
    %9 = vector.load %arg5[%c0_7, %c0_8] : memref<16x32xf32, #tpu.memory_space<vmem>>, vector<16x32xf32>
    tpu.vector_store %arg5[%c0_7, %c0_8], %8 {strides = array<i32>} : memref<16x32xf32, #tpu.memory_space<vmem>>, vector<16x32xf32>,
    return
  }
  func.func @transform_0(%arg0: i32) -> (i32, i32) {
    %c0_i32 = arith.constant 0 : i32
    %c0_i32_0 = arith.constant 0 : i32
    return %arg0, %c0_i32 : i32, i32
  }
  func.func @transform_1(%arg0: i32) -> (i32, i32) {
    %c0_i32 = arith.constant 0 : i32
    %c0_i32_0 = arith.constant 0 : i32
    %c0_i32_1 = arith.constant 0 : i32
    return %c0_i32, %c0_i32_0 : i32, i32
  }
  func.func @transform_2(%arg0: i32) -> (i32, i32) {
    %c0_i32 = arith.constant 0 : i32
    %c0_i32_0 = arith.constant 0 : i32
    %c0_i32_1 = arith.constant 0 : i32
    return %c0_i32, %c0_i32_0 : i32, i32
  }
  func.func @transform_3(%arg0: i32) -> (i32, i32) {
    %c0_i32 = arith.constant 0 : i32
    %c0_i32_0 = arith.constant 0 : i32
    return %arg0, %c0_i32 : i32, i32
  }
  func.func @transform_4(%arg0: i32) -> (i32, i32) {
    %c0_i32 = arith.constant 0 : i32
    %c0_i32_0 = arith.constant 0 : i32
    return %arg0, %c0_i32 : i32, i32
  }
}

module attributes {stable_mosaic.version = 11 : i64} {
  func.func @_matmul_bias_kernel(%arg0: i32, %arg1: memref<16x32xf32, #tpu.memory_space<vmem>>, %arg2: memref<32x96xbf16, #tpu.memory_space<vmem>>, %arg3: memref<1x96xf32, #tpu.memory_space<vmem>>, %arg4: memref<16x96xf32, #tpu.memory_space<vmem>>) attributes {dimension_semantics = [#tpu.dimension_semantics<parallel>], iteration_bounds = array<i64: 1>, scalar_prefetch = 0 : i64, scratch_operands = 0 : i64, tpu.core_type = #tpu.core_type<tc>, window_params = [{transform_indices = @transform_0, window_bounds = array<i64: 16, 32>}, {pipeline_mode = #tpu.pipeline_mode<synchronous>, transform_indices = @transform_1, window_bounds = array<i64: 32, 96>}, {pipeline_mode = #tpu.pipeline_mode<synchronous>, transform_indices = @transform_2, window_bounds = array<i64: 1, 96>}, {transform_indices = @transform_3, window_bounds = array<i64: 16, 96>}]} {
    %c0 = arith.constant 0 : index
    %c0_0 = arith.constant 0 : index
    %0 = vector.load %arg1[%c0, %c0_0] : memref<16x32xf32, #tpu.memory_space<vmem>>, vector<16x32xf32>
    %1 = arith.truncf %0 : vector<16x32xf32> to vector<16x32xbf16>
    %c0_1 = arith.constant 0 : index
    %c0_2 = arith.constant 0 : index
    %2 = vector.load %arg2[%c0_1, %c0_2] : memref<32x96xbf16, #tpu.memory_space<vmem>>, vector<32x96xbf16>
    %cst = arith.constant dense<0.000000e+00> : vector<16x96xf32>
    %3 = tpu.matmul %1, %2, %cst {dimension_numbers = #tpu.dot_dimension_numbers<[1], [0], [0], [1], [0, 0, 1, 1], [], []>} : vector<16x32xbf16>, vector<32x96xbf16>, vector<16x96xf32> -> vector<16x96xf32>
    %c0_3 = arith.constant 0 : index
    %c0_4 = arith.constant 0 : index
    %4 = vector.load %arg3[%c0_3, %c0_4] : memref<1x96xf32, #tpu.memory_space<vmem>>, vector<1x96xf32>
    %5 = vector.broadcast %4 : vector<1x96xf32> to vector<16x96xf32>
    %6 = arith.addf %3, %5 : vector<16x96xf32>
    %c0_5 = arith.constant 0 : index
    %c0_6 = arith.constant 0 : index
    %7 = vector.load %arg4[%c0_5, %c0_6] : memref<16x96xf32, #tpu.memory_space<vmem>>, vector<16x96xf32>
    tpu.vector_store %arg4[%c0_5, %c0_6], %6 {strides = array<i32>} : memref<16x96xf32, #tpu.memory_space<vmem>>, vector<16x96xf32>,
    return
  }
  func.func @transform_0(%arg0: i32) -> (i32, i32) {
    %c0_i32 = arith.constant 0 : i32
    %c0_i32_0 = arith.constant 0 : i32
    return %arg0, %c0_i32 : i32, i32
  }
  func.func @transform_1(%arg0: i32) -> (i32, i32) {
    %c0_i32 = arith.constant 0 : i32
    %c0_i32_0 = arith.constant 0 : i32
    %c0_i32_1 = arith.constant 0 : i32
    return %c0_i32, %c0_i32_0 : i32, i32
  }
  func.func @transform_2(%arg0: i32) -> (i32, i32) {
    %c0_i32 = arith.constant 0 : i32
    %c0_i32_0 = arith.constant 0 : i32
    %c0_i32_1 = arith.constant 0 : i32
    return %c0_i32, %c0_i32_0 : i32, i32
  }
  func.func @transform_3(%arg0: i32) -> (i32, i32) {
    %c0_i32 = arith.constant 0 : i32
    %c0_i32_0 = arith.constant 0 : i32
    return %arg0, %c0_i32 : i32, i32
  }
}

module attributes {stable_mosaic.version = 11 : i64} {
  func.func @_mha_kernel(%arg0: i32, %arg1: memref<1x8x96xf32, #tpu.memory_space<vmem>>, %arg2: memref<1x8x32xf32, #tpu.memory_space<vmem>>) attributes {dimension_semantics = [#tpu.dimension_semantics<parallel>], iteration_bounds = array<i64: 2>, scalar_prefetch = 0 : i64, scratch_operands = 0 : i64, tpu.core_type = #tpu.core_type<tc>, window_params = [{transform_indices = @transform_0, window_bounds = array<i64: 1, 8, 96>}, {transform_indices = @transform_1, window_bounds = array<i64: 1, 8, 32>}]} {
    %c0 = arith.constant 0 : index
    %c0_0 = arith.constant 0 : index
    %c0_1 = arith.constant 0 : index
    %0 = vector.load %arg1[%c0, %c0_0, %c0_1] : memref<1x8x96xf32, #tpu.memory_space<vmem>>, vector<1x8x96xf32>
    %1 = vector.shape_cast %0 : vector<1x8x96xf32> to vector<8x96xf32>
    %2 = vector.extract_strided_slice %1 {offsets = [0, 0], sizes = [8, 8], strides = [1, 1]} : vector<8x96xf32> to vector<8x8xf32>
    %3 = arith.truncf %2 : vector<8x8xf32> to vector<8x8xbf16>
    %4 = vector.extract_strided_slice %1 {offsets = [0, 32], sizes = [8, 8], strides = [1, 1]} : vector<8x96xf32> to vector<8x8xf32>
    %5 = arith.truncf %4 : vector<8x8xf32> to vector<8x8xbf16>
    %6 = vector.extract_strided_slice %1 {offsets = [0, 64], sizes = [8, 8], strides = [1, 1]} : vector<8x96xf32> to vector<8x8xf32>
    %7 = arith.truncf %6 : vector<8x8xf32> to vector<8x8xbf16>
    %cst = arith.constant dense<0.000000e+00> : vector<8x8xf32>
    %8 = tpu.matmul %3, %5, %cst {dimension_numbers = #tpu.dot_dimension_numbers<[1], [1], [0], [0], [0, 0, 1, 0], [], []>} : vector<8x8xbf16>, vector<8x8xbf16>, vector<8x8xf32> -> vector<8x8xf32>
    %cst_2 = arith.constant 0.353553385 : f32
    %9 = vector.broadcast %cst_2 : f32 to vector<8x8xf32>
    %10 = arith.mulf %8, %9 : vector<8x8xf32>
    %cst_3 = arith.constant dense<0xFF800000> : vector<8xf32>
    %11 = vector.multi_reduction <maximumf>, %10, %cst_3 [1] : vector<8x8xf32> to vector<8xf32>
    %12 = vector.shape_cast %11 : vector<8xf32> to vector<8x1xf32>
    %13 = vector.broadcast %12 : vector<8x1xf32> to vector<8x8xf32>
    %14 = arith.subf %10, %13 : vector<8x8xf32>
    %15 = math.exp %14 : vector<8x8xf32>
    %cst_4 = arith.constant dense<0.000000e+00> : vector<8xf32>
    %16 = vector.multi_reduction <add>, %15, %cst_4 [1] : vector<8x8xf32> to vector<8xf32>
    %17 = vector.shape_cast %16 : vector<8xf32> to vector<8x1xf32>
    %18 = tpu.reciprocal %17 {approx = true} : vector<8x1xf32> -> vector<8x1xf32>
    %19 = vector.broadcast %18 : vector<8x1xf32> to vector<8x8xf32>
    %20 = arith.mulf %15, %19 : vector<8x8xf32>
    %21 = arith.truncf %20 : vector<8x8xf32> to vector<8x8xbf16>
    %cst_5 = arith.constant dense<0.000000e+00> : vector<8x8xf32>
    %22 = tpu.matmul %21, %7, %cst_5 {dimension_numbers = #tpu.dot_dimension_numbers<[1], [0], [0], [1], [0, 0, 1, 1], [], []>} : vector<8x8xbf16>, vector<8x8xbf16>, vector<8x8xf32> -> vector<8x8xf32>
    %23 = vector.extract_strided_slice %1 {offsets = [0, 8], sizes = [8, 8], strides = [1, 1]} : vector<8x96xf32> to vector<8x8xf32>
    %24 = arith.truncf %23 : vector<8x8xf32> to vector<8x8xbf16>
    %25 = vector.extract_strided_slice %1 {offsets = [0, 40], sizes = [8, 8], strides = [1, 1]} : vector<8x96xf32> to vector<8x8xf32>
    %26 = arith.truncf %25 : vector<8x8xf32> to vector<8x8xbf16>
    %27 = vector.extract_strided_slice %1 {offsets = [0, 72], sizes = [8, 8], strides = [1, 1]} : vector<8x96xf32> to vector<8x8xf32>
    %28 = arith.truncf %27 : vector<8x8xf32> to vector<8x8xbf16>
    %cst_6 = arith.constant dense<0.000000e+00> : vector<8x8xf32>
    %29 = tpu.matmul %24, %26, %cst_6 {dimension_numbers = #tpu.dot_dimension_numbers<[1], [1], [0], [0], [0, 0, 1, 0], [], []>} : vector<8x8xbf16>, vector<8x8xbf16>, vector<8x8xf32> -> vector<8x8xf32>
    %cst_7 = arith.constant 0.353553385 : f32
    %30 = vector.broadcast %cst_7 : f32 to vector<8x8xf32>
    %31 = arith.mulf %29, %30 : vector<8x8xf32>
    %cst_8 = arith.constant dense<0xFF800000> : vector<8xf32>
    %32 = vector.multi_reduction <maximumf>, %31, %cst_8 [1] : vector<8x8xf32> to vector<8xf32>
    %33 = vector.shape_cast %32 : vector<8xf32> to vector<8x1xf32>
    %34 = vector.broadcast %33 : vector<8x1xf32> to vector<8x8xf32>
    %35 = arith.subf %31, %34 : vector<8x8xf32>
    %36 = math.exp %35 : vector<8x8xf32>
    %cst_9 = arith.constant dense<0.000000e+00> : vector<8xf32>
    %37 = vector.multi_reduction <add>, %36, %cst_9 [1] : vector<8x8xf32> to vector<8xf32>
    %38 = vector.shape_cast %37 : vector<8xf32> to vector<8x1xf32>
    %39 = tpu.reciprocal %38 {approx = true} : vector<8x1xf32> -> vector<8x1xf32>
    %40 = vector.broadcast %39 : vector<8x1xf32> to vector<8x8xf32>
    %41 = arith.mulf %36, %40 : vector<8x8xf32>
    %42 = arith.truncf %41 : vector<8x8xf32> to vector<8x8xbf16>
    %cst_10 = arith.constant dense<0.000000e+00> : vector<8x8xf32>
    %43 = tpu.matmul %42, %28, %cst_10 {dimension_numbers = #tpu.dot_dimension_numbers<[1], [0], [0], [1], [0, 0, 1, 1], [], []>} : vector<8x8xbf16>, vector<8x8xbf16>, vector<8x8xf32> -> vector<8x8xf32>
    %44 = vector.extract_strided_slice %1 {offsets = [0, 16], sizes = [8, 8], strides = [1, 1]} : vector<8x96xf32> to vector<8x8xf32>
    %45 = arith.truncf %44 : vector<8x8xf32> to vector<8x8xbf16>
    %46 = vector.extract_strided_slice %1 {offsets = [0, 48], sizes = [8, 8], strides = [1, 1]} : vector<8x96xf32> to vector<8x8xf32>
    %47 = arith.truncf %46 : vector<8x8xf32> to vector<8x8xbf16>
    %48 = vector.extract_strided_slice %1 {offsets = [0, 80], sizes = [8, 8], strides = [1, 1]} : vector<8x96xf32> to vector<8x8xf32>
    %49 = arith.truncf %48 : vector<8x8xf32> to vector<8x8xbf16>
    %cst_11 = arith.constant dense<0.000000e+00> : vector<8x8xf32>
    %50 = tpu.matmul %45, %47, %cst_11 {dimension_numbers = #tpu.dot_dimension_numbers<[1], [1], [0], [0], [0, 0, 1, 0], [], []>} : vector<8x8xbf16>, vector<8x8xbf16>, vector<8x8xf32> -> vector<8x8xf32>
    %cst_12 = arith.constant 0.353553385 : f32
    %51 = vector.broadcast %cst_12 : f32 to vector<8x8xf32>
    %52 = arith.mulf %50, %51 : vector<8x8xf32>
    %cst_13 = arith.constant dense<0xFF800000> : vector<8xf32>
    %53 = vector.multi_reduction <maximumf>, %52, %cst_13 [1] : vector<8x8xf32> to vector<8xf32>
    %54 = vector.shape_cast %53 : vector<8xf32> to vector<8x1xf32>
    %55 = vector.broadcast %54 : vector<8x1xf32> to vector<8x8xf32>
    %56 = arith.subf %52, %55 : vector<8x8xf32>
    %57 = math.exp %56 : vector<8x8xf32>
    %cst_14 = arith.constant dense<0.000000e+00> : vector<8xf32>
    %58 = vector.multi_reduction <add>, %57, %cst_14 [1] : vector<8x8xf32> to vector<8xf32>
    %59 = vector.shape_cast %58 : vector<8xf32> to vector<8x1xf32>
    %60 = tpu.reciprocal %59 {approx = true} : vector<8x1xf32> -> vector<8x1xf32>
    %61 = vector.broadcast %60 : vector<8x1xf32> to vector<8x8xf32>
    %62 = arith.mulf %57, %61 : vector<8x8xf32>
    %63 = arith.truncf %62 : vector<8x8xf32> to vector<8x8xbf16>
    %cst_15 = arith.constant dense<0.000000e+00> : vector<8x8xf32>
    %64 = tpu.matmul %63, %49, %cst_15 {dimension_numbers = #tpu.dot_dimension_numbers<[1], [0], [0], [1], [0, 0, 1, 1], [], []>} : vector<8x8xbf16>, vector<8x8xbf16>, vector<8x8xf32> -> vector<8x8xf32>
    %65 = vector.extract_strided_slice %1 {offsets = [0, 24], sizes = [8, 8], strides = [1, 1]} : vector<8x96xf32> to vector<8x8xf32>
    %66 = arith.truncf %65 : vector<8x8xf32> to vector<8x8xbf16>
    %67 = vector.extract_strided_slice %1 {offsets = [0, 56], sizes = [8, 8], strides = [1, 1]} : vector<8x96xf32> to vector<8x8xf32>
    %68 = arith.truncf %67 : vector<8x8xf32> to vector<8x8xbf16>
    %69 = vector.extract_strided_slice %1 {offsets = [0, 88], sizes = [8, 8], strides = [1, 1]} : vector<8x96xf32> to vector<8x8xf32>
    %70 = arith.truncf %69 : vector<8x8xf32> to vector<8x8xbf16>
    %cst_16 = arith.constant dense<0.000000e+00> : vector<8x8xf32>
    %71 = tpu.matmul %66, %68, %cst_16 {dimension_numbers = #tpu.dot_dimension_numbers<[1], [1], [0], [0], [0, 0, 1, 0], [], []>} : vector<8x8xbf16>, vector<8x8xbf16>, vector<8x8xf32> -> vector<8x8xf32>
    %cst_17 = arith.constant 0.353553385 : f32
    %72 = vector.broadcast %cst_17 : f32 to vector<8x8xf32>
    %73 = arith.mulf %71, %72 : vector<8x8xf32>
    %cst_18 = arith.constant dense<0xFF800000> : vector<8xf32>
    %74 = vector.multi_reduction <maximumf>, %73, %cst_18 [1] : vector<8x8xf32> to vector<8xf32>
    %75 = vector.shape_cast %74 : vector<8xf32> to vector<8x1xf32>
    %76 = vector.broadcast %75 : vector<8x1xf32> to vector<8x8xf32>
    %77 = arith.subf %73, %76 : vector<8x8xf32>
    %78 = math.exp %77 : vector<8x8xf32>
    %cst_19 = arith.constant dense<0.000000e+00> : vector<8xf32>
    %79 = vector.multi_reduction <add>, %78, %cst_19 [1] : vector<8x8xf32> to vector<8xf32>
    %80 = vector.shape_cast %79 : vector<8xf32> to vector<8x1xf32>
    %81 = tpu.reciprocal %80 {approx = true} : vector<8x1xf32> -> vector<8x1xf32>
    %82 = vector.broadcast %81 : vector<8x1xf32> to vector<8x8xf32>
    %83 = arith.mulf %78, %82 : vector<8x8xf32>
    %84 = arith.truncf %83 : vector<8x8xf32> to vector<8x8xbf16>
    %cst_20 = arith.constant dense<0.000000e+00> : vector<8x8xf32>
    %85 = tpu.matmul %84, %70, %cst_20 {dimension_numbers = #tpu.dot_dimension_numbers<[1], [0], [0], [1], [0, 0, 1, 1], [], []>} : vector<8x8xbf16>, vector<8x8xbf16>, vector<8x8xf32> -> vector<8x8xf32>
    %86 = tpu.concatenate %22, %43, %64, %85 in 1 : vector<8x8xf32>, vector<8x8xf32>, vector<8x8xf32>, vector<8x8xf32> -> vector<8x32xf32>
    %c0_21 = arith.constant 0 : index
    %c0_22 = arith.constant 0 : index
    %c0_23 = arith.constant 0 : index
    %87 = vector.load %arg2[%c0_21, %c0_22, %c0_23] : memref<1x8x32xf32, #tpu.memory_space<vmem>>, vector<1x8x32xf32>
    %88 = vector.shape_cast %87 : vector<1x8x32xf32> to vector<8x32xf32>
    %89 = vector.shape_cast %86 : vector<8x32xf32> to vector<1x8x32xf32>
    tpu.vector_store %arg2[%c0_21, %c0_22, %c0_23], %89 {strides = array<i32>} : memref<1x8x32xf32, #tpu.memory_space<vmem>>, vector<1x8x32xf32>,
    return
  }
  func.func @transform_0(%arg0: i32) -> (i32, i32, i32) {
    %c0_i32 = arith.constant 0 : i32
    %c0_i32_0 = arith.constant 0 : i32
    %c0_i32_1 = arith.constant 0 : i32
    return %arg0, %c0_i32, %c0_i32_0 : i32, i32, i32
  }
  func.func @transform_1(%arg0: i32) -> (i32, i32, i32) {
    %c0_i32 = arith.constant 0 : i32
    %c0_i32_0 = arith.constant 0 : i32
    %c0_i32_1 = arith.constant 0 : i32
    return %arg0, %c0_i32, %c0_i32_0 : i32, i32, i32
  }
}

module attributes {stable_mosaic.version = 11 : i64} {
  func.func @_proj_res_ln_kernel(%arg0: i32, %arg1: memref<16x32xf32, #tpu.memory_space<vmem>>, %arg2: memref<32x32xbf16, #tpu.memory_space<vmem>>, %arg3: memref<1x32xf32, #tpu.memory_space<vmem>>, %arg4: memref<16x32xf32, #tpu.memory_space<vmem>>, %arg5: memref<1x32xf32, #tpu.memory_space<vmem>>, %arg6: memref<1x32xf32, #tpu.memory_space<vmem>>, %arg7: memref<16x32xf32, #tpu.memory_space<vmem>>) attributes {dimension_semantics = [#tpu.dimension_semantics<parallel>], iteration_bounds = array<i64: 1>, scalar_prefetch = 0 : i64, scratch_operands = 0 : i64, tpu.core_type = #tpu.core_type<tc>, window_params = [{transform_indices = @transform_0, window_bounds = array<i64: 16, 32>}, {pipeline_mode = #tpu.pipeline_mode<synchronous>, transform_indices = @transform_1, window_bounds = array<i64: 32, 32>}, {pipeline_mode = #tpu.pipeline_mode<synchronous>, transform_indices = @transform_2, window_bounds = array<i64: 1, 32>}, {transform_indices = @transform_3, window_bounds = array<i64: 16, 32>}, {pipeline_mode = #tpu.pipeline_mode<synchronous>, transform_indices = @transform_4, window_bounds = array<i64: 1, 32>}, {pipeline_mode = #tpu.pipeline_mode<synchronous>, transform_indices = @transform_5, window_bounds = array<i64: 1, 32>}, {transform_indices = @transform_6, window_bounds = array<i64: 16, 32>}]} {
    %c0 = arith.constant 0 : index
    %c0_0 = arith.constant 0 : index
    %0 = vector.load %arg1[%c0, %c0_0] : memref<16x32xf32, #tpu.memory_space<vmem>>, vector<16x32xf32>
    %1 = arith.truncf %0 : vector<16x32xf32> to vector<16x32xbf16>
    %c0_1 = arith.constant 0 : index
    %c0_2 = arith.constant 0 : index
    %2 = vector.load %arg2[%c0_1, %c0_2] : memref<32x32xbf16, #tpu.memory_space<vmem>>, vector<32x32xbf16>
    %cst = arith.constant dense<0.000000e+00> : vector<16x32xf32>
    %3 = tpu.matmul %1, %2, %cst {dimension_numbers = #tpu.dot_dimension_numbers<[1], [0], [0], [1], [0, 0, 1, 1], [], []>} : vector<16x32xbf16>, vector<32x32xbf16>, vector<16x32xf32> -> vector<16x32xf32>
    %c0_3 = arith.constant 0 : index
    %c0_4 = arith.constant 0 : index
    %4 = vector.load %arg3[%c0_3, %c0_4] : memref<1x32xf32, #tpu.memory_space<vmem>>, vector<1x32xf32>
    %5 = vector.broadcast %4 : vector<1x32xf32> to vector<16x32xf32>
    %6 = arith.addf %3, %5 : vector<16x32xf32>
    %c0_5 = arith.constant 0 : index
    %c0_6 = arith.constant 0 : index
    %7 = vector.load %arg4[%c0_5, %c0_6] : memref<16x32xf32, #tpu.memory_space<vmem>>, vector<16x32xf32>
    %8 = arith.addf %6, %7 : vector<16x32xf32>
    %cst_7 = arith.constant dense<0.000000e+00> : vector<16xf32>
    %9 = vector.multi_reduction <add>, %8, %cst_7 [1] : vector<16x32xf32> to vector<16xf32>
    %10 = vector.shape_cast %9 : vector<16xf32> to vector<16x1xf32>
    %cst_8 = arith.constant 3.200000e+01 : f32
    %11 = vector.broadcast %cst_8 : f32 to vector<16x1xf32>
    %12 = arith.divf %10, %11 : vector<16x1xf32>
    %13 = vector.broadcast %12 : vector<16x1xf32> to vector<16x32xf32>
    %14 = arith.subf %8, %13 : vector<16x32xf32>
    %15 = arith.mulf %14, %14 : vector<16x32xf32>
    %cst_9 = arith.constant dense<0.000000e+00> : vector<16xf32>
    %16 = vector.multi_reduction <add>, %15, %cst_9 [1] : vector<16x32xf32> to vector<16xf32>
    %17 = vector.shape_cast %16 : vector<16xf32> to vector<16x1xf32>
    %cst_10 = arith.constant 3.200000e+01 : f32
    %18 = vector.broadcast %cst_10 : f32 to vector<16x1xf32>
    %19 = arith.divf %17, %18 : vector<16x1xf32>
    %20 = vector.broadcast %12 : vector<16x1xf32> to vector<16x32xf32>
    %21 = arith.subf %8, %20 : vector<16x32xf32>
    %cst_11 = arith.constant 9.99999974E-6 : f32
    %22 = vector.broadcast %cst_11 : f32 to vector<16x1xf32>
    %23 = arith.addf %19, %22 : vector<16x1xf32>
    %24 = math.rsqrt %23 : vector<16x1xf32>
    %25 = vector.broadcast %24 : vector<16x1xf32> to vector<16x32xf32>
    %26 = arith.mulf %21, %25 : vector<16x32xf32>
    %c0_12 = arith.constant 0 : index
    %c0_13 = arith.constant 0 : index
    %27 = vector.load %arg5[%c0_12, %c0_13] : memref<1x32xf32, #tpu.memory_space<vmem>>, vector<1x32xf32>
    %28 = vector.broadcast %27 : vector<1x32xf32> to vector<16x32xf32>
    %29 = arith.mulf %26, %28 : vector<16x32xf32>
    %c0_14 = arith.constant 0 : index
    %c0_15 = arith.constant 0 : index
    %30 = vector.load %arg6[%c0_14, %c0_15] : memref<1x32xf32, #tpu.memory_space<vmem>>, vector<1x32xf32>
    %31 = vector.broadcast %30 : vector<1x32xf32> to vector<16x32xf32>
    %32 = arith.addf %29, %31 : vector<16x32xf32>
    %c0_16 = arith.constant 0 : index
    %c0_17 = arith.constant 0 : index
    %33 = vector.load %arg7[%c0_16, %c0_17] : memref<16x32xf32, #tpu.memory_space<vmem>>, vector<16x32xf32>
    tpu.vector_store %arg7[%c0_16, %c0_17], %32 {strides = array<i32>} : memref<16x32xf32, #tpu.memory_space<vmem>>, vector<16x32xf32>,
    return
  }
  func.func @transform_0(%arg0: i32) -> (i32, i32) {
    %c0_i32 = arith.constant 0 : i32
    %c0_i32_0 = arith.constant 0 : i32
    return %arg0, %c0_i32 : i32, i32
  }
  func.func @transform_1(%arg0: i32) -> (i32, i32) {
    %c0_i32 = arith.constant 0 : i32
    %c0_i32_0 = arith.constant 0 : i32
    %c0_i32_1 = arith.constant 0 : i32
    return %c0_i32, %c0_i32_0 : i32, i32
  }
  func.func @transform_2(%arg0: i32) -> (i32, i32) {
    %c0_i32 = arith.constant 0 : i32
    %c0_i32_0 = arith.constant 0 : i32
    %c0_i32_1 = arith.constant 0 : i32
    return %c0_i32, %c0_i32_0 : i32, i32
  }
  func.func @transform_3(%arg0: i32) -> (i32, i32) {
    %c0_i32 = arith.constant 0 : i32
    %c0_i32_0 = arith.constant 0 : i32
    return %arg0, %c0_i32 : i32, i32
  }
  func.func @transform_4(%arg0: i32) -> (i32, i32) {
    %c0_i32 = arith.constant 0 : i32
    %c0_i32_0 = arith.constant 0 : i32
    %c0_i32_1 = arith.constant 0 : i32
    return %c0_i32, %c0_i32_0 : i32, i32
  }
  func.func @transform_5(%arg0: i32) -> (i32, i32) {
    %c0_i32 = arith.constant 0 : i32
    %c0_i32_0 = arith.constant 0 : i32
    %c0_i32_1 = arith.constant 0 : i32
    return %c0_i32, %c0_i32_0 : i32, i32
  }
  func.func @transform_6(%arg0: i32) -> (i32, i32) {
    %c0_i32 = arith.constant 0 : i32
    %c0_i32_0 = arith.constant 0 : i32
    return %arg0, %c0_i32 : i32, i32
  }
}

module attributes {stable_mosaic.version = 11 : i64} {
  func.func @_ffn_res_ln_kernel(%arg0: i32, %arg1: memref<16x32xf32, #tpu.memory_space<vmem>>, %arg2: memref<32x64xbf16, #tpu.memory_space<vmem>>, %arg3: memref<1x64xf32, #tpu.memory_space<vmem>>, %arg4: memref<64x32xbf16, #tpu.memory_space<vmem>>, %arg5: memref<1x32xf32, #tpu.memory_space<vmem>>, %arg6: memref<1x32xf32, #tpu.memory_space<vmem>>, %arg7: memref<1x32xf32, #tpu.memory_space<vmem>>, %arg8: memref<16x32xf32, #tpu.memory_space<vmem>>) attributes {dimension_semantics = [#tpu.dimension_semantics<parallel>], iteration_bounds = array<i64: 1>, scalar_prefetch = 0 : i64, scratch_operands = 0 : i64, tpu.core_type = #tpu.core_type<tc>, window_params = [{transform_indices = @transform_0, window_bounds = array<i64: 16, 32>}, {pipeline_mode = #tpu.pipeline_mode<synchronous>, transform_indices = @transform_1, window_bounds = array<i64: 32, 64>}, {pipeline_mode = #tpu.pipeline_mode<synchronous>, transform_indices = @transform_2, window_bounds = array<i64: 1, 64>}, {pipeline_mode = #tpu.pipeline_mode<synchronous>, transform_indices = @transform_3, window_bounds = array<i64: 64, 32>}, {pipeline_mode = #tpu.pipeline_mode<synchronous>, transform_indices = @transform_4, window_bounds = array<i64: 1, 32>}, {pipeline_mode = #tpu.pipeline_mode<synchronous>, transform_indices = @transform_5, window_bounds = array<i64: 1, 32>}, {pipeline_mode = #tpu.pipeline_mode<synchronous>, transform_indices = @transform_6, window_bounds = array<i64: 1, 32>}, {transform_indices = @transform_7, window_bounds = array<i64: 16, 32>}]} {
    %c0 = arith.constant 0 : index
    %c0_0 = arith.constant 0 : index
    %0 = vector.load %arg1[%c0, %c0_0] : memref<16x32xf32, #tpu.memory_space<vmem>>, vector<16x32xf32>
    %1 = arith.truncf %0 : vector<16x32xf32> to vector<16x32xbf16>
    %c0_1 = arith.constant 0 : index
    %c0_2 = arith.constant 0 : index
    %2 = vector.load %arg2[%c0_1, %c0_2] : memref<32x64xbf16, #tpu.memory_space<vmem>>, vector<32x64xbf16>
    %cst = arith.constant dense<0.000000e+00> : vector<16x64xf32>
    %3 = tpu.matmul %1, %2, %cst {dimension_numbers = #tpu.dot_dimension_numbers<[1], [0], [0], [1], [0, 0, 1, 1], [], []>} : vector<16x32xbf16>, vector<32x64xbf16>, vector<16x64xf32> -> vector<16x64xf32>
    %c0_3 = arith.constant 0 : index
    %c0_4 = arith.constant 0 : index
    %4 = vector.load %arg3[%c0_3, %c0_4] : memref<1x64xf32, #tpu.memory_space<vmem>>, vector<1x64xf32>
    %5 = vector.broadcast %4 : vector<1x64xf32> to vector<16x64xf32>
    %6 = arith.addf %3, %5 : vector<16x64xf32>
    %cst_5 = arith.constant 0.000000e+00 : f32
    %7 = vector.broadcast %cst_5 : f32 to vector<16x64xf32>
    %8 = arith.maximumf %6, %7 : vector<16x64xf32>
    %9 = arith.truncf %8 : vector<16x64xf32> to vector<16x64xbf16>
    %c0_6 = arith.constant 0 : index
    %c0_7 = arith.constant 0 : index
    %10 = vector.load %arg4[%c0_6, %c0_7] : memref<64x32xbf16, #tpu.memory_space<vmem>>, vector<64x32xbf16>
    %cst_8 = arith.constant dense<0.000000e+00> : vector<16x32xf32>
    %11 = tpu.matmul %9, %10, %cst_8 {dimension_numbers = #tpu.dot_dimension_numbers<[1], [0], [0], [1], [0, 0, 1, 1], [], []>} : vector<16x64xbf16>, vector<64x32xbf16>, vector<16x32xf32> -> vector<16x32xf32>
    %c0_9 = arith.constant 0 : index
    %c0_10 = arith.constant 0 : index
    %12 = vector.load %arg5[%c0_9, %c0_10] : memref<1x32xf32, #tpu.memory_space<vmem>>, vector<1x32xf32>
    %13 = vector.broadcast %12 : vector<1x32xf32> to vector<16x32xf32>
    %14 = arith.addf %11, %13 : vector<16x32xf32>
    %15 = arith.addf %14, %0 : vector<16x32xf32>
    %cst_11 = arith.constant dense<0.000000e+00> : vector<16xf32>
    %16 = vector.multi_reduction <add>, %15, %cst_11 [1] : vector<16x32xf32> to vector<16xf32>
    %17 = vector.shape_cast %16 : vector<16xf32> to vector<16x1xf32>
    %cst_12 = arith.constant 3.200000e+01 : f32
    %18 = vector.broadcast %cst_12 : f32 to vector<16x1xf32>
    %19 = arith.divf %17, %18 : vector<16x1xf32>
    %20 = vector.broadcast %19 : vector<16x1xf32> to vector<16x32xf32>
    %21 = arith.subf %15, %20 : vector<16x32xf32>
    %22 = arith.mulf %21, %21 : vector<16x32xf32>
    %cst_13 = arith.constant dense<0.000000e+00> : vector<16xf32>
    %23 = vector.multi_reduction <add>, %22, %cst_13 [1] : vector<16x32xf32> to vector<16xf32>
    %24 = vector.shape_cast %23 : vector<16xf32> to vector<16x1xf32>
    %cst_14 = arith.constant 3.200000e+01 : f32
    %25 = vector.broadcast %cst_14 : f32 to vector<16x1xf32>
    %26 = arith.divf %24, %25 : vector<16x1xf32>
    %27 = vector.broadcast %19 : vector<16x1xf32> to vector<16x32xf32>
    %28 = arith.subf %15, %27 : vector<16x32xf32>
    %cst_15 = arith.constant 9.99999974E-6 : f32
    %29 = vector.broadcast %cst_15 : f32 to vector<16x1xf32>
    %30 = arith.addf %26, %29 : vector<16x1xf32>
    %31 = math.rsqrt %30 : vector<16x1xf32>
    %32 = vector.broadcast %31 : vector<16x1xf32> to vector<16x32xf32>
    %33 = arith.mulf %28, %32 : vector<16x32xf32>
    %c0_16 = arith.constant 0 : index
    %c0_17 = arith.constant 0 : index
    %34 = vector.load %arg6[%c0_16, %c0_17] : memref<1x32xf32, #tpu.memory_space<vmem>>, vector<1x32xf32>
    %35 = vector.broadcast %34 : vector<1x32xf32> to vector<16x32xf32>
    %36 = arith.mulf %33, %35 : vector<16x32xf32>
    %c0_18 = arith.constant 0 : index
    %c0_19 = arith.constant 0 : index
    %37 = vector.load %arg7[%c0_18, %c0_19] : memref<1x32xf32, #tpu.memory_space<vmem>>, vector<1x32xf32>
    %38 = vector.broadcast %37 : vector<1x32xf32> to vector<16x32xf32>
    %39 = arith.addf %36, %38 : vector<16x32xf32>
    %c0_20 = arith.constant 0 : index
    %c0_21 = arith.constant 0 : index
    %40 = vector.load %arg8[%c0_20, %c0_21] : memref<16x32xf32, #tpu.memory_space<vmem>>, vector<16x32xf32>
    tpu.vector_store %arg8[%c0_20, %c0_21], %39 {strides = array<i32>} : memref<16x32xf32, #tpu.memory_space<vmem>>, vector<16x32xf32>,
    return
  }
  func.func @transform_0(%arg0: i32) -> (i32, i32) {
    %c0_i32 = arith.constant 0 : i32
    %c0_i32_0 = arith.constant 0 : i32
    return %arg0, %c0_i32 : i32, i32
  }
  func.func @transform_1(%arg0: i32) -> (i32, i32) {
    %c0_i32 = arith.constant 0 : i32
    %c0_i32_0 = arith.constant 0 : i32
    %c0_i32_1 = arith.constant 0 : i32
    return %c0_i32, %c0_i32_0 : i32, i32
  }
  func.func @transform_2(%arg0: i32) -> (i32, i32) {
    %c0_i32 = arith.constant 0 : i32
    %c0_i32_0 = arith.constant 0 : i32
    %c0_i32_1 = arith.constant 0 : i32
    return %c0_i32, %c0_i32_0 : i32, i32
  }
  func.func @transform_3(%arg0: i32) -> (i32, i32) {
    %c0_i32 = arith.constant 0 : i32
    %c0_i32_0 = arith.constant 0 : i32
    %c0_i32_1 = arith.constant 0 : i32
    return %c0_i32, %c0_i32_0 : i32, i32
  }
  func.func @transform_4(%arg0: i32) -> (i32, i32) {
    %c0_i32 = arith.constant 0 : i32
    %c0_i32_0 = arith.constant 0 : i32
    %c0_i32_1 = arith.constant 0 : i32
    return %c0_i32, %c0_i32_0 : i32, i32
  }
  func.func @transform_5(%arg0: i32) -> (i32, i32) {
    %c0_i32 = arith.constant 0 : i32
    %c0_i32_0 = arith.constant 0 : i32
    %c0_i32_1 = arith.constant 0 : i32
    return %c0_i32, %c0_i32_0 : i32, i32
  }
  func.func @transform_6(%arg0: i32) -> (i32, i32) {
    %c0_i32 = arith.constant 0 : i32
    %c0_i32_0 = arith.constant 0 : i32
    %c0_i32_1 = arith.constant 0 : i32
    return %c0_i32, %c0_i32_0 : i32, i32
  }
  func.func @transform_7(%arg0: i32) -> (i32, i32) {
    %c0_i32 = arith.constant 0 : i32
    %c0_i32_0 = arith.constant 0 : i32
    return %arg0, %c0_i32 : i32, i32
  }
}

module attributes {stable_mosaic.version = 11 : i64} {
  func.func @_matmul_bias_kernel(%arg0: i32, %arg1: memref<2x32xf32, #tpu.memory_space<vmem>>, %arg2: memref<32x128xbf16, #tpu.memory_space<vmem>>, %arg3: memref<1x128xf32, #tpu.memory_space<vmem>>, %arg4: memref<2x128xf32, #tpu.memory_space<vmem>>) attributes {dimension_semantics = [#tpu.dimension_semantics<parallel>], iteration_bounds = array<i64: 1>, scalar_prefetch = 0 : i64, scratch_operands = 0 : i64, tpu.core_type = #tpu.core_type<tc>, window_params = [{transform_indices = @transform_0, window_bounds = array<i64: 2, 32>}, {pipeline_mode = #tpu.pipeline_mode<synchronous>, transform_indices = @transform_1, window_bounds = array<i64: 32, 128>}, {pipeline_mode = #tpu.pipeline_mode<synchronous>, transform_indices = @transform_2, window_bounds = array<i64: 1, 128>}, {transform_indices = @transform_3, window_bounds = array<i64: 2, 128>}]} {
    %c0 = arith.constant 0 : index
    %c0_0 = arith.constant 0 : index
    %0 = vector.load %arg1[%c0, %c0_0] : memref<2x32xf32, #tpu.memory_space<vmem>>, vector<2x32xf32>
    %1 = arith.truncf %0 : vector<2x32xf32> to vector<2x32xbf16>
    %c0_1 = arith.constant 0 : index
    %c0_2 = arith.constant 0 : index
    %2 = vector.load %arg2[%c0_1, %c0_2] : memref<32x128xbf16, #tpu.memory_space<vmem>>, vector<32x128xbf16>
    %cst = arith.constant dense<0.000000e+00> : vector<2x128xf32>
    %3 = tpu.matmul %1, %2, %cst {dimension_numbers = #tpu.dot_dimension_numbers<[1], [0], [0], [1], [0, 0, 1, 1], [], []>} : vector<2x32xbf16>, vector<32x128xbf16>, vector<2x128xf32> -> vector<2x128xf32>
    %c0_3 = arith.constant 0 : index
    %c0_4 = arith.constant 0 : index
    %4 = vector.load %arg3[%c0_3, %c0_4] : memref<1x128xf32, #tpu.memory_space<vmem>>, vector<1x128xf32>
    %5 = vector.broadcast %4 : vector<1x128xf32> to vector<2x128xf32>
    %6 = arith.addf %3, %5 : vector<2x128xf32>
    %c0_5 = arith.constant 0 : index
    %c0_6 = arith.constant 0 : index
    %7 = vector.load %arg4[%c0_5, %c0_6] : memref<2x128xf32, #tpu.memory_space<vmem>>, vector<2x128xf32>
    tpu.vector_store %arg4[%c0_5, %c0_6], %6 {strides = array<i32>} : memref<2x128xf32, #tpu.memory_space<vmem>>, vector<2x128xf32>,
    return
  }
  func.func @transform_0(%arg0: i32) -> (i32, i32) {
    %c0_i32 = arith.constant 0 : i32
    %c0_i32_0 = arith.constant 0 : i32
    return %arg0, %c0_i32 : i32, i32
  }
  func.func @transform_1(%arg0: i32) -> (i32, i32) {
    %c0_i32 = arith.constant 0 : i32
    %c0_i32_0 = arith.constant 0 : i32
    %c0_i32_1 = arith.constant 0 : i32
    return %c0_i32, %c0_i32_0 : i32, i32
  }
  func.func @transform_2(%arg0: i32) -> (i32, i32) {
    %c0_i32 = arith.constant 0 : i32
    %c0_i32_0 = arith.constant 0 : i32
    %c0_i32_1 = arith.constant 0 : i32
    return %c0_i32, %c0_i32_0 : i32, i32
  }
  func.func @transform_3(%arg0: i32) -> (i32, i32) {
    %c0_i32 = arith.constant 0 : i32
    %c0_i32_0 = arith.constant 0 : i32
    return %arg0, %c0_i32 : i32, i32
  }
}

</mosaic_0001>

<llo_original>
// kernel: transformer_forward.10
$region0: #{transformer_forward.10}
  #allocation0 [shape = 'u32[]', space=smem, size = 0x4, offset = 0x4, fixed_abs, tag = 'smem constant byte address 0x4 - core index']
  #allocation1 [shape = 'u32[144,128]{1,0:T(1,128)}', space=vmem, size = 0x12000, scoped, tag = 'internal scratch']
  %s0 = inlined_call_operand.vmem [shape: f32[16,4], index: 0, kind: input, shape index: {}]
  %s1 = inlined_call_operand.vmem [shape: bf16[4,32], index: 1, kind: input, shape index: {}]
  %s2 = inlined_call_operand.vmem [shape: f32[1,32], index: 2, kind: input, shape index: {}]
  %s3 = inlined_call_operand.vmem [shape: f32[16,32], index: 3, kind: input, shape index: {}]
  %s4 = inlined_call_operand.vmem [shape: f32[16,32], index: 4, kind: output, shape index: {}]
  %s5 = sld [smem:[#allocation0]]
  $region26: #{transformer_forward.10} parent=0
    _
  %s7 = ssub.s32 1, %s5
  %s8 = scalar_select 0, %s7, %s5
  // Predicated region
  $region2: #{transformer_forward.10} parent=0 // pred_check
    _
  $region3: #{transformer_forward.10} parent=0 // pred_check_branch
    %10 = sbr.rel (0) target = $region5
  $region4: #{transformer_forward.10} parent=0 // pred_region
    _
  $region5: #{transformer_forward.10} parent=0 // pred_fallthru
    _
  // Predicated region
  $region6: #{transformer_forward.10} parent=0 // pred_check
    _
  $region7: #{transformer_forward.10} parent=0 // pred_check_branch
    %12 = sbr.rel (0) target = $region9
  $region8: #{transformer_forward.10} parent=0 // pred_region
    _
  $region9: #{transformer_forward.10} parent=0 // pred_fallthru
    _
  // Predicated region
  $region10: #{transformer_forward.10} parent=0 // pred_check
    _
  $region11: #{transformer_forward.10} parent=0 // pred_check_branch
    %14 = sbr.rel (0) target = $region13
  $region12: #{transformer_forward.10} parent=0 // pred_region
    _
  $region13: #{transformer_forward.10} parent=0 // pred_fallthru
    _
  // Predicated region
  $region14: #{transformer_forward.10} parent=0 // pred_check
    _
  $region15: #{transformer_forward.10} parent=0 // pred_check_branch
    %16 = sbr.rel (0) target = $region17
  $region16: #{transformer_forward.10} parent=0 // pred_region
    _
  $region17: #{transformer_forward.10} parent=0 // pred_fallthru
    _
  %v18 = vld [vmem:[%s0] sm:$0xff]
  %v19 = vld [vmem:[%s0 + $0x8] sm:$0xff]
  %v20 = vpack.c.bf16 %v19, %v18
  %v21 = vld [vmem:[%s1] sm:$0x3]
  %v22 = vld [vmem:[%s2] sm:$0x1]
  %v24 = vlaneseq
  %v25 = vshrl.u32 %v24, 7
  %v26 = vsub.s32 0, %v25
  %v27 = vrot.slane %v22, %v26
  %vm29 = vcmask 31744
  %v31 = vsel %vm29, %v20, 0
  %vm33 = vcmask 1041408
  %v35 = vsel %vm33, %v21, 0
  %37 = vmatprep.subr.bf16.mxu0 0
  %38 = vmatpush1.bf16.msra.mxu0 0
  %39 = vmatprep.subr.bf16.mxu0 0
  %40 = vmatpush1.bf16.msra.mxu0 0
  %41 = vmatprep.subr.bf16.mxu0 0
  %42 = vmatpush1.bf16.msra.mxu0 0
  %43 = vmatprep.subr.bf16.mxu0 0
  %44 = vmatpush1.bf16.msra.mxu0 0
  %45 = vmatprep.subr.bf16.mxu0 0
  %46 = vmatpush1.bf16.msra.mxu0 0
  %47 = vmatprep.subr.bf16.mxu0 0
  %48 = vmatpush1.bf16.msra.mxu0 0
  %49 = vmatprep.subr.bf16.mxu0 0
  %50 = vmatpush1.bf16.msra.mxu0 0
  %51 = vmatprep.subr.bf16.mxu0 0
  %52 = vmatpush1.bf16.msra.mxu0 %v35
  %53 = vmatprep.subr.bf16.mxu0 0
  %54 = vmatpush2.bf16.msra.mxu0 0
  %55 = vmatprep.subr.bf16.mxu0 0
  %56 = vmatpush2.bf16.msra.mxu0 0
  %57 = vmatprep.subr.bf16.mxu0 0
  %58 = vmatpush2.bf16.msra.mxu0 0
  %59 = vmatprep.subr.bf16.mxu0 0
  %60 = vmatpush2.bf16.msra.mxu0 0
  %61 = vmatprep.subr.bf16.mxu0 0
  %62 = vmatpush2.bf16.msra.mxu0 0
  %63 = vmatprep.subr.bf16.mxu0 0
  %64 = vmatpush2.bf16.msra.mxu0 0
  %65 = vmatprep.subr.bf16.mxu0 0
  %66 = vmatpush2.bf16.msra.mxu0 0
  %67 = vmatprep.subr.bf16.mxu0 0
  %68 = vmatpush2.bf16.msra.mxu0 0
  %69 = vmatprep.mubr.bf16.mxu0 0
  %70 = vmatmul.mubr.bf16.gmra.mxu0 %v31
  %v71 = vpop.f32.mrf.mxu0
  %v72 = vadd.f32 %v27, %v71
  %v73 = vpop.f32.mrf.mxu0
  %v74 = vpop.f32.mrf.mxu0
  %v75 = vadd.f32 %v27, %v74
  %v76 = vpop.f32.mrf.mxu0
  %77 = vdwg.mxu0
  %v78 = vld [vmem:[%s3] sm:$0xff]
  %v79 = vld [vmem:[%s3 + $0x8] sm:$0xff]
  %v80 = vadd.f32 %v72, %v78
  %v81 = vadd.f32 %v75, %v79
  %vm82 = vcmask 261120
  %83 = vst.msk [vmem:[%s4] sm:$0xff] %vm82, %v80
  %84 = vst.msk [vmem:[%s4 + $0x8] sm:$0xff] %vm82, %v81
  // Predicated region
  $region18: #{transformer_forward.10} parent=0 // pred_check
    _
  $region19: #{transformer_forward.10} parent=0 // pred_check_branch
    %86 = sbr.rel (0) target = $region21
  $region20: #{transformer_forward.10} parent=0 // pred_region
    _
  $region21: #{transformer_forward.10} parent=0 // pred_fallthru
    _
  // Predicated region
  $region22: #{transformer_forward.10} parent=0 // pred_check
    _
  $region23: #{transformer_forward.10} parent=0 // pred_check_branch
    %88 = sbr.rel (0) target = $region25
  $region24: #{transformer_forward.10} parent=0 // pred_region
    _
  $region25: #{transformer_forward.10} parent=0 // pred_fallthru
    _

// kernel: transformer_forward.11
$region0: #{transformer_forward.11}
  #allocation0 [shape = 'u32[]', space=smem, size = 0x4, offset = 0x4, fixed_abs, tag = 'smem constant byte address 0x4 - core index']
  #allocation1 [shape = 'u32[144,128]{1,0:T(1,128)}', space=vmem, size = 0x12000, scoped, tag = 'internal scratch']
  %s0 = inlined_call_operand.vmem [shape: f32[16,32], index: 0, kind: input, shape index: {}]
  %s1 = inlined_call_operand.vmem [shape: bf16[32,96], index: 1, kind: input, shape index: {}]
  %s2 = inlined_call_operand.vmem [shape: f32[1,96], index: 2, kind: input, shape index: {}]
  %s3 = inlined_call_operand.vmem [shape: f32[16,96], index: 3, kind: output, shape index: {}]
  %s4 = sld [smem:[#allocation0]]
  $region22: #{transformer_forward.11} parent=0
    _
  %s6 = ssub.s32 1, %s4
  %s7 = scalar_select 0, %s6, %s4
  // Predicated region
  $region2: #{transformer_forward.11} parent=0 // pred_check
    _
  $region3: #{transformer_forward.11} parent=0 // pred_check_branch
    %9 = sbr.rel (0) target = $region5
  $region4: #{transformer_forward.11} parent=0 // pred_region
    _
  $region5: #{transformer_forward.11} parent=0 // pred_fallthru
    _
  // Predicated region
  $region6: #{transformer_forward.11} parent=0 // pred_check
    _
  $region7: #{transformer_forward.11} parent=0 // pred_check_branch
    %11 = sbr.rel (0) target = $region9
  $region8: #{transformer_forward.11} parent=0 // pred_region
    _
  $region9: #{transformer_forward.11} parent=0 // pred_fallthru
    _
  // Predicated region
  $region10: #{transformer_forward.11} parent=0 // pred_check
    _
  $region11: #{transformer_forward.11} parent=0 // pred_check_branch
    %13 = sbr.rel (0) target = $region13
  $region12: #{transformer_forward.11} parent=0 // pred_region
    _
  $region13: #{transformer_forward.11} parent=0 // pred_fallthru
    _
  %v15 = vld [vmem:[%s0] sm:$0xff]
  %v16 = vld [vmem:[%s0 + $0x8] sm:$0xff]
  %v17 = vpack.c.bf16 %v16, %v15
  %v18 = vld [vmem:[%s1] sm:$0xf]
  %v19 = vld [vmem:[%s1 + $0x4] sm:$0xf]
  %v20 = vld [vmem:[%s1 + $0x8] sm:$0xf]
  %v21 = vld [vmem:[%s1 + $0xc] sm:$0xf]
  %v22 = vld [vmem:[%s2] sm:$0x1]
  %v24 = vlaneseq
  %v25 = vshrl.u32 %v24, 7
  %v26 = vsub.s32 0, %v25
  %v27 = vrot.slane %v22, %v26
  %v33 = vunpack.c.l.b16 %v18
  %v34 = vunpack.c.l.b16 %v19
  %v35 = vunpack.c.l.b16 %v20
  %v36 = vunpack.c.l.b16 %v21
  %v37 = vpack.c.b16 %v34, %v33
  %v38 = vpack.c.b16 %v36, %v35
  %vm41 = vcmask 261120
  %v43 = vsel %vm41, %v17, 0
  %45 = vmatprep.subr.bf16.mxu0 0
  %46 = vmatpush1.bf16.msra.mxu0 0
  %47 = vmatprep.subr.bf16.mxu0 0
  %48 = vmatpush1.bf16.msra.mxu0 0
  %49 = vmatprep.subr.bf16.mxu0 0
  %50 = vmatpush1.bf16.msra.mxu0 0
  %51 = vmatprep.subr.bf16.mxu0 0
  %52 = vmatpush1.bf16.msra.mxu0 0
  %53 = vmatprep.subr.bf16.mxu0 0
  %54 = vmatpush1.bf16.msra.mxu0 0
  %55 = vmatprep.subr.bf16.mxu0 0
  %56 = vmatpush1.bf16.msra.mxu0 0
  %57 = vmatprep.subr.bf16.mxu0 0
  %58 = vmatpush1.bf16.msra.mxu0 %v38
  %59 = vmatprep.subr.bf16.mxu0 0
  %60 = vmatpush1.bf16.msra.mxu0 %v37
  %61 = vmatprep.subr.bf16.mxu0 0
  %62 = vmatpush2.bf16.msra.mxu0 0
  %63 = vmatprep.subr.bf16.mxu0 0
  %64 = vmatpush2.bf16.msra.mxu0 0
  %65 = vmatprep.subr.bf16.mxu0 0
  %66 = vmatpush2.bf16.msra.mxu0 0
  %67 = vmatprep.subr.bf16.mxu0 0
  %68 = vmatpush2.bf16.msra.mxu0 0
  %69 = vmatprep.subr.bf16.mxu0 0
  %70 = vmatpush2.bf16.msra.mxu0 0
  %71 = vmatprep.subr.bf16.mxu0 0
  %72 = vmatpush2.bf16.msra.mxu0 0
  %73 = vmatprep.subr.bf16.mxu0 0
  %74 = vmatpush2.bf16.msra.mxu0 0
  %75 = vmatprep.subr.bf16.mxu0 0
  %76 = vmatpush2.bf16.msra.mxu0 0
  %77 = vmatprep.mubr.bf16.mxu0 0
  %78 = vmatmul.mubr.bf16.gmra.mxu0 %v43
  %v79 = vpop.f32.mrf.mxu0
  %v80 = vadd.f32 %v27, %v79
  %v81 = vpop.f32.mrf.mxu0
  %v82 = vpop.f32.mrf.mxu0
  %v83 = vadd.f32 %v27, %v82
  %v84 = vpop.f32.mrf.mxu0
  %85 = vdwg.mxu0
  %vm86 = vcmask 785408
  %87 = vst.msk [vmem:[%s3] sm:$0xff] %vm86, %v80
  %88 = vst.msk [vmem:[%s3 + $0x8] sm:$0xff] %vm86, %v83
  // Predicated region
  $region14: #{transformer_forward.11} parent=0 // pred_check
    _
  $region15: #{transformer_forward.11} parent=0 // pred_check_branch
    %90 = sbr.rel (0) target = $region17
  $region16: #{transformer_forward.11} parent=0 // pred_region
    _
  $region17: #{transformer_forward.11} parent=0 // pred_fallthru
    _
  // Predicated region
  $region18: #{transformer_forward.11} parent=0 // pred_check
    _
  $region19: #{transformer_forward.11} parent=0 // pred_check_branch
    %92 = sbr.rel (0) target = $region21
  $region20: #{transformer_forward.11} parent=0 // pred_region
    _
  $region21: #{transformer_forward.11} parent=0 // pred_fallthru
    _

// kernel: transformer_forward.13
$region0: #{transformer_forward.13}
  #allocation0 [shape = 'u32[]', space=smem, size = 0x4, offset = 0x4, fixed_abs, tag = 'smem constant byte address 0x4 - core index']
  #allocation1 [shape = 'u32[144,128]{1,0:T(1,128)}', space=vmem, size = 0x12000, scoped, tag = 'internal scratch']
  %s0 = inlined_call_operand.vmem [shape: f32[16,32], index: 0, kind: input, shape index: {}]
  %s1 = inlined_call_operand.vmem [shape: bf16[32,32], index: 1, kind: input, shape index: {}]
  %s2 = inlined_call_operand.vmem [shape: f32[1,32], index: 2, kind: input, shape index: {}]
  %s3 = inlined_call_operand.vmem [shape: f32[16,32], index: 3, kind: input, shape index: {}]
  %s4 = inlined_call_operand.vmem [shape: f32[1,32], index: 4, kind: input, shape index: {}]
  %s5 = inlined_call_operand.vmem [shape: f32[1,32], index: 5, kind: input, shape index: {}]
  %s6 = inlined_call_operand.vmem [shape: f32[16,32], index: 6, kind: output, shape index: {}]
  %s7 = sld [smem:[#allocation0]]
  $region34: #{transformer_forward.13} parent=0
    _
  %s9 = ssub.s32 1, %s7
  %s10 = scalar_select 0, %s9, %s7
  // Predicated region
  $region2: #{transformer_forward.13} parent=0 // pred_check
    _
  $region3: #{transformer_forward.13} parent=0 // pred_check_branch
    %12 = sbr.rel (0) target = $region5
  $region4: #{transformer_forward.13} parent=0 // pred_region
    _
  $region5: #{transformer_forward.13} parent=0 // pred_fallthru
    _
  // Predicated region
  $region6: #{transformer_forward.13} parent=0 // pred_check
    _
  $region7: #{transformer_forward.13} parent=0 // pred_check_branch
    %14 = sbr.rel (0) target = $region9
  $region8: #{transformer_forward.13} parent=0 // pred_region
    _
  $region9: #{transformer_forward.13} parent=0 // pred_fallthru
    _
  // Predicated region
  $region10: #{transformer_forward.13} parent=0 // pred_check
    _
  $region11: #{transformer_forward.13} parent=0 // pred_check_branch
    %16 = sbr.rel (0) target = $region13
  $region12: #{transformer_forward.13} parent=0 // pred_region
    _
  $region13: #{transformer_forward.13} parent=0 // pred_fallthru
    _
  // Predicated region
  $region14: #{transformer_forward.13} parent=0 // pred_check
    _
  $region15: #{transformer_forward.13} parent=0 // pred_check_branch
    %18 = sbr.rel (0) target = $region17
  $region16: #{transformer_forward.13} parent=0 // pred_region
    _
  $region17: #{transformer_forward.13} parent=0 // pred_fallthru
    _
  // Predicated region
  $region18: #{transformer_forward.13} parent=0 // pred_check
    _
  $region19: #{transformer_forward.13} parent=0 // pred_check_branch
    %20 = sbr.rel (0) target = $region21
  $region20: #{transformer_forward.13} parent=0 // pred_region
    _
  $region21: #{transformer_forward.13} parent=0 // pred_fallthru
    _
  // Predicated region
  $region22: #{transformer_forward.13} parent=0 // pred_check
    _
  $region23: #{transformer_forward.13} parent=0 // pred_check_branch
    %22 = sbr.rel (0) target = $region25
  $region24: #{transformer_forward.13} parent=0 // pred_region
    _
  $region25: #{transformer_forward.13} parent=0 // pred_fallthru
    _
  %v24 = vld [vmem:[%s0] sm:$0xff]
  %v25 = vld [vmem:[%s0 + $0x8] sm:$0xff]
  %v26 = vpack.c.bf16 %v25, %v24
  %v27 = vld [vmem:[%s1] sm:$0xf]
  %v28 = vld [vmem:[%s1 + $0x4] sm:$0xf]
  %v29 = vld [vmem:[%s1 + $0x8] sm:$0xf]
  %v30 = vld [vmem:[%s1 + $0xc] sm:$0xf]
  %v31 = vld [vmem:[%s2] sm:$0x1]
  %v33 = vlaneseq
  %v34 = vshrl.u32 %v33, 7
  %v35 = vsub.s32 0, %v34
  %v36 = vrot.slane %v31, %v35
  %v42 = vunpack.c.l.b16 %v27
  %v43 = vunpack.c.l.b16 %v28
  %v44 = vunpack.c.l.b16 %v29
  %v45 = vunpack.c.l.b16 %v30
  %v46 = vpack.c.b16 %v43, %v42
  %v47 = vpack.c.b16 %v45, %v44
  %vm50 = vcmask 261120
  %v52 = vsel %vm50, %v26, 0
  %54 = vmatprep.subr.bf16.mxu0 0
  %55 = vmatpush1.bf16.msra.mxu0 0
  %56 = vmatprep.subr.bf16.mxu0 0
  %57 = vmatpush1.bf16.msra.mxu0 0
  %58 = vmatprep.subr.bf16.mxu0 0
  %59 = vmatpush1.bf16.msra.mxu0 0
  %60 = vmatprep.subr.bf16.mxu0 0
  %61 = vmatpush1.bf16.msra.mxu0 0
  %62 = vmatprep.subr.bf16.mxu0 0
  %63 = vmatpush1.bf16.msra.mxu0 0
  %64 = vmatprep.subr.bf16.mxu0 0
  %65 = vmatpush1.bf16.msra.mxu0 0
  %66 = vmatprep.subr.bf16.mxu0 0
  %67 = vmatpush1.bf16.msra.mxu0 %v47
  %68 = vmatprep.subr.bf16.mxu0 0
  %69 = vmatpush1.bf16.msra.mxu0 %v46
  %70 = vmatprep.subr.bf16.mxu0 0
  %71 = vmatpush2.bf16.msra.mxu0 0
  %72 = vmatprep.subr.bf16.mxu0 0
  %73 = vmatpush2.bf16.msra.mxu0 0
  %74 = vmatprep.subr.bf16.mxu0 0
  %75 = vmatpush2.bf16.msra.mxu0 0
  %76 = vmatprep.subr.bf16.mxu0 0
  %77 = vmatpush2.bf16.msra.mxu0 0
  %78 = vmatprep.subr.bf16.mxu0 0
  %79 = vmatpush2.bf16.msra.mxu0 0
  %80 = vmatprep.subr.bf16.mxu0 0
  %81 = vmatpush2.bf16.msra.mxu0 0
  %82 = vmatprep.subr.bf16.mxu0 0
  %83 = vmatpush2.bf16.msra.mxu0 0
  %84 = vmatprep.subr.bf16.mxu0 0
  %85 = vmatpush2.bf16.msra.mxu0 0
  %86 = vmatprep.mubr.bf16.mxu0 0
  %87 = vmatmul.mubr.bf16.gmra.mxu0 %v52
  %v88 = vpop.f32.mrf.mxu0
  %v89 = vadd.f32 %v36, %v88
  %v90 = vpop.f32.mrf.mxu0
  %v91 = vpop.f32.mrf.mxu0
  %v92 = vadd.f32 %v36, %v91
  %v93 = vpop.f32.mrf.mxu0
  %94 = vdwg.mxu0
  %v95 = vld [vmem:[%s3] sm:$0xff]
  %v96 = vld [vmem:[%s3 + $0x8] sm:$0xff]
  %v97 = vadd.f32 %v89, %v95
  %v98 = vadd.f32 %v92, %v96
  %v99 = vsel %vm50, %v97, 0.0
  %100 = vadd.xlane.f32.xlu0 %v99
  %v101 = vpop.xlane.xlu0 %100
  %v102 = vsel %vm50, %v98, 0.0
  %103 = vadd.xlane.f32.xlu0 %v102
  %v104 = vpop.xlane.xlu0 %103
  %v105 = vrcp.pop 32.0
  %v106 = vmul.f32 %v101, %v105
  %v107 = vmul.f32 %v104, %v105
  %v108 = vsub.f32 %v97, %v106
  %v109 = vsub.f32 %v98, %v107
  %v110 = vmul.f32 %v108, %v108
  %v111 = vmul.f32 %v109, %v109
  %v112 = vsel %vm50, %v110, 0.0
  %113 = vadd.xlane.f32.xlu0 %v112
  %v114 = vpop.xlane.xlu0 %113
  %v115 = vsel %vm50, %v111, 0.0
  %116 = vadd.xlane.f32.xlu0 %v115
  %v117 = vpop.xlane.xlu0 %116
  %v118 = vmul.f32 %v114, %v105
  %v119 = vmul.f32 %v117, %v105
  %v120 = vadd.f32 %v118, 1e-05
  %v121 = vadd.f32 %v119, 1e-05
  %v122 = vrsqrt.pop %v120
  %v123 = vrsqrt.pop %v121
  %v124 = vmul.f32 %v108, %v122
  %v125 = vmul.f32 %v109, %v123
  %v126 = vld [vmem:[%s4] sm:$0x1]
  %v128 = vlaneseq
  %v129 = vshrl.u32 %v128, 7
  %v130 = vsub.s32 0, %v129
  %v131 = vrot.slane %v126, %v130
  %v133 = vmul.f32 %v124, %v131
  %v134 = vmul.f32 %v125, %v131
  %v135 = vld [vmem:[%s5] sm:$0x1]
  %v137 = vlaneseq
  %v138 = vshrl.u32 %v137, 7
  %v139 = vsub.s32 0, %v138
  %v140 = vrot.slane %v135, %v139
  %v142 = vadd.f32 %v133, %v140
  %v143 = vadd.f32 %v134, %v140
  %144 = vst.msk [vmem:[%s6] sm:$0xff] %vm50, %v142
  %145 = vst.msk [vmem:[%s6 + $0x8] sm:$0xff] %vm50, %v143
  // Predicated region
  $region26: #{transformer_forward.13} parent=0 // pred_check
    _
  $region27: #{transformer_forward.13} parent=0 // pred_check_branch
    %147 = sbr.rel (0) target = $region29
  $region28: #{transformer_forward.13} parent=0 // pred_region
    _
  $region29: #{transformer_forward.13} parent=0 // pred_fallthru
    _
  // Predicated region
  $region30: #{transformer_forward.13} parent=0 // pred_check
    _
  $region31: #{transformer_forward.13} parent=0 // pred_check_branch
    %149 = sbr.rel (0) target = $region33
  $region32: #{transformer_forward.13} parent=0 // pred_region
    _
  $region33: #{transformer_forward.13} parent=0 // pred_fallthru
    _

// kernel: transformer_forward.12
$region0: #{transformer_forward.12}
  #allocation0 [shape = 'u32[]', space=smem, size = 0x4, offset = 0x4, fixed_abs, tag = 'smem constant byte address 0x4 - core index']
  #allocation1 [shape = 'u32[144,128]{1,0:T(1,128)}', space=vmem, size = 0x12000, scoped, tag = 'internal scratch']
  %s0 = inlined_call_operand.vmem [shape: f32[2,8,96], index: 0, kind: input, shape index: {}]
  %s1 = inlined_call_operand.vmem [shape: f32[2,8,32], index: 1, kind: output, shape index: {}]
  %s2 = sld [smem:[#allocation0]]
  $region37: #{transformer_forward.12} parent=0
    _
  %s4 = ssub.s32 1, %s2
  %s5 = scalar_select 0, %s4, %s2
  loop: start=0, step=1, limit=4
  $region2: #{transformer_forward.12} parent=0 // loop_pre_header
    _
  $region3: #{transformer_forward.12} parent=0 // loop_header
    %s7 = sphi 0, %s11
    %p8 = scmp.ge.s32.totalorder %s7, 4
    %s17 = sphi 0, %s19
    %s20 = sphi 0, %s17
    %s21 = sphi 0, %s20
    %s37 = sphi 0, %s21
    %s43 = sphi 0, %s45
    %s46 = sphi 0, %s43
    %s47 = sphi 0, %s46
    %s63 = sphi 0, %s47
  $region4: #{transformer_forward.12} parent=0 // loop_header_branch
    %10 = sbr.rel (%p8) target = $region8
  $region5: #{transformer_forward.12} parent=0 // loop_body
    %s12 = ssub.s32 %s7, 1
    %s13 = ssub.s32 %s7, 2
    %s14 = sadd.s32 %s7, 1
    %s15 = ssub.s32 %s7, %s14
    %p16 = scmp.eq.s32.totalorder %s15, 0
    %s18 = sadd.s32 %s17, 1
    %s19 = scalar_select %p16, %s17, %s18
    %p22 = pneg %p16
    %p23 = scmp.eq.s32.totalorder %s7, 1
    %p24 = por %p22, %p23
    %p25 = scmp.ne.s32.totalorder %s17, %s20
    %p26 = scmp.eq.s32.totalorder %s7, 0
    %p27 = por %p25, %p26
    %p28 = scmp.ne.s32.totalorder %s17, %s20
    %p29 = scmp.eq.s32.totalorder %s12, 1
    %p30 = por %p28, %p29
    %p31 = scmp.ne.s32.totalorder %s20, %s21
    %p32 = scmp.eq.s32.totalorder %s12, 0
    %p33 = por %p31, %p32
    %p34 = scmp.ne.s32.totalorder %s20, %s21
    %p35 = scmp.eq.s32.totalorder %s13, 1
    %p36 = por %p34, %p35
    %p38 = scmp.ne.s32.totalorder %s21, %s37
    %p39 = scmp.eq.s32.totalorder %s13, 0
    %p40 = por %p38, %p39
    %s41 = ssub.s32 %s7, %s14
    %p42 = scmp.eq.s32.totalorder %s41, 0
    %s44 = sadd.s32 %s43, 1
    %s45 = scalar_select %p42, %s43, %s44
    %p48 = pneg %p42
    %p49 = scmp.eq.s32.totalorder %s7, 1
    %p50 = por %p48, %p49
    %p51 = scmp.ne.s32.totalorder %s43, %s46
    %p52 = scmp.eq.s32.totalorder %s7, 0
    %p53 = por %p51, %p52
    %p54 = scmp.ne.s32.totalorder %s43, %s46
    %p55 = scmp.eq.s32.totalorder %s12, 1
    %p56 = por %p54, %p55
    %p57 = scmp.ne.s32.totalorder %s46, %s47
    %p58 = scmp.eq.s32.totalorder %s12, 0
    %p59 = por %p57, %p58
    %p60 = scmp.ne.s32.totalorder %s46, %s47
    %p61 = scmp.eq.s32.totalorder %s13, 1
    %p62 = por %p60, %p61
    %p64 = scmp.ne.s32.totalorder %s47, %s63
    %p65 = scmp.eq.s32.totalorder %s13, 0
    %p66 = por %p64, %p65
    %p67 = scmp.le.s32.totalorder 1, %s7
    %p68 = scmp.lt.s32.totalorder %s7, 3
    %p69 = pnand %p67, %p68
    %p70 = pneg %p69
    // Predicated region
    $region9: #{transformer_forward.12} parent=5 // pred_check
      _
    $region10: #{transformer_forward.12} parent=5 // pred_check_branch
      %72 = sbr.rel (%p69) target = $region12
    $region11: #{transformer_forward.12} parent=5 // pred_region
      %s73 = ssub.s32 %s7, 1
    $region12: #{transformer_forward.12} parent=5 // pred_fallthru
      _
    %p74 = scmp.lt.s32.totalorder %s7, 2
    // Predicated region
    $region13: #{transformer_forward.12} parent=5 // pred_check
      %p75 = pneg %p74
    $region14: #{transformer_forward.12} parent=5 // pred_check_branch
      %77 = sbr.rel (%p75) target = $region16
    $region15: #{transformer_forward.12} parent=5 // pred_region
      // Predicated region
      $region17: #{transformer_forward.12} parent=15 // pred_check
        %p78 = pneg %p27
      $region18: #{transformer_forward.12} parent=15 // pred_check_branch
        %80 = sbr.rel (%p78) target = $region20
      $region19: #{transformer_forward.12} parent=15 // pred_region
        %p81 = scmp.lt.s32.totalorder %s7, 1
        %s82 = scalar_select %p81, %s7, 1
        %s83 = smul.addr %s82, 8
        %s84 = scalar_lea.vmem %s0, %s83
      $region20: #{transformer_forward.12} parent=15 // pred_fallthru
        _
    $region16: #{transformer_forward.12} parent=5 // pred_fallthru
      _
    %p85 = scmp.le.s32.totalorder 1, %s7
    %p86 = scmp.lt.s32.totalorder %s7, 3
    %p87 = pnand %p85, %p86
    %p88 = pneg %p87
    // Predicated region
    $region21: #{transformer_forward.12} parent=5 // pred_check
      _
    $region22: #{transformer_forward.12} parent=5 // pred_check_branch
      %90 = sbr.rel (%p87) target = $region24
    $region23: #{transformer_forward.12} parent=5 // pred_region
      %s91 = ssub.s32 %s7, 1
      %p92 = scmp.lt.s32.totalorder %s12, 1
      %s93 = scalar_select %p92, %s12, 1
      %s94 = smul.addr %s93, 8
      %s95 = scalar_lea.vmem %s0, %s94
      %p96 = pneg %p33
      %p97 = pneg %p30
      %p98 = pneg %p59
      %p99 = pneg %p56
      %p100 = scmp.lt.s32.totalorder %s12, 1
      %s101 = scalar_select %p100, %s12, 1
      %s102 = smul.addr %s101, 8
      %s103 = scalar_lea.vmem %s1, %s102
      %p104 = scmp.lt.s32.totalorder %s12, 1
      %s105 = scalar_select %p104, %s12, 1
      %s106 = smul.addr %s105, 8
      %s107 = scalar_lea.vmem %s0, %s106
      %p108 = scmp.lt.s32.totalorder %s12, 1
      %s109 = scalar_select %p108, %s12, 1
      %s110 = smul.addr %s109, 8
      %s111 = scalar_lea.vmem %s1, %s110
      %v113 = vld [vmem:[%s107] sm:$0xff]
      %v114 = vpack.c.bf16 %v113, %v113
      %116 = vrot.lane.b32.xlu0 %v114, 96
      %v117 = vpop.permute.xlu0 %116
      %vm118 = vcmask 64512
      %v120 = vsel %vm118, %v114, 0
      %v123 = vsel %vm118, %v117, 0
      %125 = vmatprep.subr.bf16.mxu0 0
      %126 = vmatpush1.bf16.xpose.msra.mxu0 0
      %127 = vmatprep.subr.bf16.mxu0 0
      %128 = vmatpush1.bf16.xpose.msra.mxu0 0
      %129 = vmatprep.subr.bf16.mxu0 0
      %130 = vmatpush1.bf16.xpose.msra.mxu0 0
      %131 = vmatprep.subr.bf16.mxu0 0
      %132 = vmatpush1.bf16.xpose.msra.mxu0 0
      %133 = vmatprep.subr.bf16.mxu0 0
      %134 = vmatpush1.bf16.xpose.msra.mxu0 0
      %135 = vmatprep.subr.bf16.mxu0 0
      %136 = vmatpush1.bf16.xpose.msra.mxu0 0
      %137 = vmatprep.subr.bf16.mxu0 0
      %138 = vmatpush1.bf16.xpose.msra.mxu0 0
      %139 = vmatprep.subr.bf16.mxu0 0
      %140 = vmatpush1.bf16.xpose.msra.mxu0 %v123
      %141 = vmatprep.subr.bf16.mxu0 0
      %142 = vmatpush2.bf16.xpose.msra.mxu0 0
      %143 = vmatprep.subr.bf16.mxu0 0
      %144 = vmatpush2.bf16.xpose.msra.mxu0 0
      %145 = vmatprep.subr.bf16.mxu0 0
      %146 = vmatpush2.bf16.xpose.msra.mxu0 0
      %147 = vmatprep.subr.bf16.mxu0 0
      %148 = vmatpush2.bf16.xpose.msra.mxu0 0
      %149 = vmatprep.subr.bf16.mxu0 0
      %150 = vmatpush2.bf16.xpose.msra.mxu0 0
      %151 = vmatprep.subr.bf16.mxu0 0
      %152 = vmatpush2.bf16.xpose.msra.mxu0 0
      %153 = vmatprep.subr.bf16.mxu0 0
      %154 = vmatpush2.bf16.xpose.msra.mxu0 0
      %155 = vmatprep.subr.bf16.mxu0 0
      %156 = vmatpush2.bf16.xpose.msra.mxu0 0
      %157 = vmatprep.mubr.bf16.mxu0 0
      %158 = vmatmul.mubr.bf16.gmra.mxu0 %v120
      %v159 = vpop.f32.mrf.mxu0
      %v160 = vadd.f32 0.0, %v159
      %v161 = vpop.f32.mrf.mxu0
      %v162 = vpop.f32.mrf.mxu0
      %v163 = vpop.f32.mrf.mxu0
      %164 = vdwg.mxu0
      %v165 = vmul.f32 %v160, 0.35355338
      %v166 = vsel %vm118, %v165, -inf
      %167 = vmax.xlane.f32.xlu0 %v166
      %v168 = vpop.xlane.xlu0 %167
      %v169 = vsub.f32 %v165, %v168
      %v170 = vmul.f32 %v169, 1.442695
      %v171 = vpow.pop %v170
      %v172 = vsel %vm118, %v171, 0.0
      %173 = vadd.xlane.f32.xlu0 %v172
      %v174 = vpop.xlane.xlu0 %173
      %v175 = vrcp.pop %v174
      %v176 = vmul.f32 %v171, %v175
      %v177 = vpack.c.bf16 %v176, %v176
      %178 = vrot.lane.b32.xlu0 %v114, 64
      %v179 = vpop.permute.xlu0 %178
      %v181 = vsel %vm118, %v177, 0
      %vm183 = vcmask 1043456
      %v185 = vsel %vm183, %v179, 0
      %187 = vmatprep.subr.bf16.mxu0 0
      %188 = vmatpush1.bf16.msra.mxu0 0
      %189 = vmatprep.subr.bf16.mxu0 0
      %190 = vmatpush1.bf16.msra.mxu0 0
      %191 = vmatprep.subr.bf16.mxu0 0
      %192 = vmatpush1.bf16.msra.mxu0 0
      %193 = vmatprep.subr.bf16.mxu0 0
      %194 = vmatpush1.bf16.msra.mxu0 0
      %195 = vmatprep.subr.bf16.mxu0 0
      %196 = vmatpush1.bf16.msra.mxu0 0
      %197 = vmatprep.subr.bf16.mxu0 0
      %198 = vmatpush1.bf16.msra.mxu0 0
      %199 = vmatprep.subr.bf16.mxu0 0
      %200 = vmatpush1.bf16.msra.mxu0 0
      %201 = vmatprep.subr.bf16.mxu0 0
      %202 = vmatpush1.bf16.msra.mxu0 %v185
      %203 = vmatprep.subr.bf16.mxu0 0
      %204 = vmatpush2.bf16.msra.mxu0 0
      %205 = vmatprep.subr.bf16.mxu0 0
      %206 = vmatpush2.bf16.msra.mxu0 0
      %207 = vmatprep.subr.bf16.mxu0 0
      %208 = vmatpush2.bf16.msra.mxu0 0
      %209 = vmatprep.subr.bf16.mxu0 0
      %210 = vmatpush2.bf16.msra.mxu0 0
      %211 = vmatprep.subr.bf16.mxu0 0
      %212 = vmatpush2.bf16.msra.mxu0 0
      %213 = vmatprep.subr.bf16.mxu0 0
      %214 = vmatpush2.bf16.msra.mxu0 0
      %215 = vmatprep.subr.bf16.mxu0 0
      %216 = vmatpush2.bf16.msra.mxu0 0
      %217 = vmatprep.subr.bf16.mxu0 0
      %218 = vmatpush2.bf16.msra.mxu0 0
      %219 = vmatprep.mubr.bf16.mxu0 0
      %220 = vmatmul.mubr.bf16.gmra.mxu0 %v181
      %v221 = vpop.f32.mrf.mxu0
      %v222 = vadd.f32 0.0, %v221
      %v223 = vpop.f32.mrf.mxu0
      %v224 = vpop.f32.mrf.mxu0
      %v225 = vpop.f32.mrf.mxu0
      %226 = vdwg.mxu0
      %227 = vrot.lane.b32.xlu0 %v114, 120
      %v228 = vpop.permute.xlu0 %227
      %229 = vrot.lane.b32.xlu0 %v114, 88
      %v230 = vpop.permute.xlu0 %229
      %v232 = vsel %vm118, %v228, 0
      %v235 = vsel %vm118, %v230, 0
      %237 = vmatprep.subr.bf16.mxu0 0
      %238 = vmatpush1.bf16.xpose.msra.mxu0 0
      %239 = vmatprep.subr.bf16.mxu0 0
      %240 = vmatpush1.bf16.xpose.msra.mxu0 0
      %241 = vmatprep.subr.bf16.mxu0 0
      %242 = vmatpush1.bf16.xpose.msra.mxu0 0
      %243 = vmatprep.subr.bf16.mxu0 0
      %244 = vmatpush1.bf16.xpose.msra.mxu0 0
      %245 = vmatprep.subr.bf16.mxu0 0
      %246 = vmatpush1.bf16.xpose.msra.mxu0 0
      %247 = vmatprep.subr.bf16.mxu0 0
      %248 = vmatpush1.bf16.xpose.msra.mxu0 0
      %249 = vmatprep.subr.bf16.mxu0 0
      %250 = vmatpush1.bf16.xpose.msra.mxu0 0
      %251 = vmatprep.subr.bf16.mxu0 0
      %252 = vmatpush1.bf16.xpose.msra.mxu0 %v235
      %253 = vmatprep.subr.bf16.mxu0 0
      %254 = vmatpush2.bf16.xpose.msra.mxu0 0
      %255 = vmatprep.subr.bf16.mxu0 0
      %256 = vmatpush2.bf16.xpose.msra.mxu0 0
      %257 = vmatprep.subr.bf16.mxu0 0
      %258 = vmatpush2.bf16.xpose.msra.mxu0 0
      %259 = vmatprep.subr.bf16.mxu0 0
      %260 = vmatpush2.bf16.xpose.msra.mxu0 0
      %261 = vmatprep.subr.bf16.mxu0 0
      %262 = vmatpush2.bf16.xpose.msra.mxu0 0
      %263 = vmatprep.subr.bf16.mxu0 0
      %264 = vmatpush2.bf16.xpose.msra.mxu0 0
      %265 = vmatprep.subr.bf16.mxu0 0
      %266 = vmatpush2.bf16.xpose.msra.mxu0 0
      %267 = vmatprep.subr.bf16.mxu0 0
      %268 = vmatpush2.bf16.xpose.msra.mxu0 0
      %269 = vmatprep.mubr.bf16.mxu0 0
      %270 = vmatmul.mubr.bf16.gmra.mxu0 %v232
      %v271 = vpop.f32.mrf.mxu0
      %v272 = vadd.f32 0.0, %v271
      %v273 = vpop.f32.mrf.mxu0
      %v274 = vpop.f32.mrf.mxu0
      %v275 = vpop.f32.mrf.mxu0
      %276 = vdwg.mxu0
      %v277 = vmul.f32 %v272, 0.35355338
      %v278 = vsel %vm118, %v277, -inf
      %279 = vmax.xlane.f32.xlu0 %v278
      %v280 = vpop.xlane.xlu0 %279
      %v281 = vsub.f32 %v277, %v280
      %v282 = vmul.f32 %v281, 1.442695
      %v283 = vpow.pop %v282
      %v284 = vsel %vm118, %v283, 0.0
      %285 = vadd.xlane.f32.xlu0 %v284
      %v286 = vpop.xlane.xlu0 %285
      %v287 = vrcp.pop %v286
      %v288 = vmul.f32 %v283, %v287
      %v289 = vpack.c.bf16 %v288, %v288
      %290 = vrot.lane.b32.xlu0 %v114, 56
      %v291 = vpop.permute.xlu0 %290
      %v293 = vsel %vm118, %v289, 0
      %v296 = vsel %vm183, %v291, 0
      %298 = vmatprep.subr.bf16.mxu0 0
      %299 = vmatpush1.bf16.msra.mxu0 0
      %300 = vmatprep.subr.bf16.mxu0 0
      %301 = vmatpush1.bf16.msra.mxu0 0
      %302 = vmatprep.subr.bf16.mxu0 0
      %303 = vmatpush1.bf16.msra.mxu0 0
      %304 = vmatprep.subr.bf16.mxu0 0
      %305 = vmatpush1.bf16.msra.mxu0 0
      %306 = vmatprep.subr.bf16.mxu0 0
      %307 = vmatpush1.bf16.msra.mxu0 0
      %308 = vmatprep.subr.bf16.mxu0 0
      %309 = vmatpush1.bf16.msra.mxu0 0
      %310 = vmatprep.subr.bf16.mxu0 0
      %311 = vmatpush1.bf16.msra.mxu0 0
      %312 = vmatprep.subr.bf16.mxu0 0
      %313 = vmatpush1.bf16.msra.mxu0 %v296
      %314 = vmatprep.subr.bf16.mxu0 0
      %315 = vmatpush2.bf16.msra.mxu0 0
      %316 = vmatprep.subr.bf16.mxu0 0
      %317 = vmatpush2.bf16.msra.mxu0 0
      %318 = vmatprep.subr.bf16.mxu0 0
      %319 = vmatpush2.bf16.msra.mxu0 0
      %320 = vmatprep.subr.bf16.mxu0 0
      %321 = vmatpush2.bf16.msra.mxu0 0
      %322 = vmatprep.subr.bf16.mxu0 0
      %323 = vmatpush2.bf16.msra.mxu0 0
      %324 = vmatprep.subr.bf16.mxu0 0
      %325 = vmatpush2.bf16.msra.mxu0 0
      %326 = vmatprep.subr.bf16.mxu0 0
      %327 = vmatpush2.bf16.msra.mxu0 0
      %328 = vmatprep.subr.bf16.mxu0 0
      %329 = vmatpush2.bf16.msra.mxu0 0
      %330 = vmatprep.mubr.bf16.mxu0 0
      %331 = vmatmul.mubr.bf16.gmra.mxu0 %v293
      %v332 = vpop.f32.mrf.mxu0
      %v333 = vadd.f32 0.0, %v332
      %v334 = vpop.f32.mrf.mxu0
      %v335 = vpop.f32.mrf.mxu0
      %v336 = vpop.f32.mrf.mxu0
      %337 = vdwg.mxu0
      %338 = vrot.lane.b32.xlu0 %v114, 112
      %v339 = vpop.permute.xlu0 %338
      %340 = vrot.lane.b32.xlu0 %v114, 80
      %v341 = vpop.permute.xlu0 %340
      %v343 = vsel %vm118, %v339, 0
      %v346 = vsel %vm118, %v341, 0
      %348 = vmatprep.subr.bf16.mxu0 0
      %349 = vmatpush1.bf16.xpose.msra.mxu0 0
      %350 = vmatprep.subr.bf16.mxu0 0
      %351 = vmatpush1.bf16.xpose.msra.mxu0 0
      %352 = vmatprep.subr.bf16.mxu0 0
      %353 = vmatpush1.bf16.xpose.msra.mxu0 0
      %354 = vmatprep.subr.bf16.mxu0 0
      %355 = vmatpush1.bf16.xpose.msra.mxu0 0
      %356 = vmatprep.subr.bf16.mxu0 0
      %357 = vmatpush1.bf16.xpose.msra.mxu0 0
      %358 = vmatprep.subr.bf16.mxu0 0
      %359 = vmatpush1.bf16.xpose.msra.mxu0 0
      %360 = vmatprep.subr.bf16.mxu0 0
      %361 = vmatpush1.bf16.xpose.msra.mxu0 0
      %362 = vmatprep.subr.bf16.mxu0 0
      %363 = vmatpush1.bf16.xpose.msra.mxu0 %v346
      %364 = vmatprep.subr.bf16.mxu0 0
      %365 = vmatpush2.bf16.xpose.msra.mxu0 0
      %366 = vmatprep.subr.bf16.mxu0 0
      %367 = vmatpush2.bf16.xpose.msra.mxu0 0
      %368 = vmatprep.subr.bf16.mxu0 0
      %369 = vmatpush2.bf16.xpose.msra.mxu0 0
      %370 = vmatprep.subr.bf16.mxu0 0
      %371 = vmatpush2.bf16.xpose.msra.mxu0 0
      %372 = vmatprep.subr.bf16.mxu0 0
      %373 = vmatpush2.bf16.xpose.msra.mxu0 0
      %374 = vmatprep.subr.bf16.mxu0 0
      %375 = vmatpush2.bf16.xpose.msra.mxu0 0
      %376 = vmatprep.subr.bf16.mxu0 0
      %377 = vmatpush2.bf16.xpose.msra.mxu0 0
      %378 = vmatprep.subr.bf16.mxu0 0
      %379 = vmatpush2.bf16.xpose.msra.mxu0 0
      %380 = vmatprep.mubr.bf16.mxu0 0
      %381 = vmatmul.mubr.bf16.gmra.mxu0 %v343
      %v382 = vpop.f32.mrf.mxu0
      %v383 = vadd.f32 0.0, %v382
      %v384 = vpop.f32.mrf.mxu0
      %v385 = vpop.f32.mrf.mxu0
      %v386 = vpop.f32.mrf.mxu0
      %387 = vdwg.mxu0
      %v388 = vmul.f32 %v383, 0.35355338
      %v389 = vsel %vm118, %v388, -inf
      %390 = vmax.xlane.f32.xlu0 %v389
      %v391 = vpop.xlane.xlu0 %390
      %v392 = vsub.f32 %v388, %v391
      %v393 = vmul.f32 %v392, 1.442695
      %v394 = vpow.pop %v393
      %v395 = vsel %vm118, %v394, 0.0
      %396 = vadd.xlane.f32.xlu0 %v395
      %v397 = vpop.xlane.xlu0 %396
      %v398 = vrcp.pop %v397
      %v399 = vmul.f32 %v394, %v398
      %v400 = vpack.c.bf16 %v399, %v399
      %401 = vrot.lane.b32.xlu0 %v114, 48
      %v402 = vpop.permute.xlu0 %401
      %v404 = vsel %vm118, %v400, 0
      %v407 = vsel %vm183, %v402, 0
      %409 = vmatprep.subr.bf16.mxu0 0
      %410 = vmatpush1.bf16.msra.mxu0 0
      %411 = vmatprep.subr.bf16.mxu0 0
      %412 = vmatpush1.bf16.msra.mxu0 0
      %413 = vmatprep.subr.bf16.mxu0 0
      %414 = vmatpush1.bf16.msra.mxu0 0
      %415 = vmatprep.subr.bf16.mxu0 0
      %416 = vmatpush1.bf16.msra.mxu0 0
      %417 = vmatprep.subr.bf16.mxu0 0
      %418 = vmatpush1.bf16.msra.mxu0 0
      %419 = vmatprep.subr.bf16.mxu0 0
      %420 = vmatpush1.bf16.msra.mxu0 0
      %421 = vmatprep.subr.bf16.mxu0 0
      %422 = vmatpush1.bf16.msra.mxu0 0
      %423 = vmatprep.subr.bf16.mxu0 0
      %424 = vmatpush1.bf16.msra.mxu0 %v407
      %425 = vmatprep.subr.bf16.mxu0 0
      %426 = vmatpush2.bf16.msra.mxu0 0
      %427 = vmatprep.subr.bf16.mxu0 0
      %428 = vmatpush2.bf16.msra.mxu0 0
      %429 = vmatprep.subr.bf16.mxu0 0
      %430 = vmatpush2.bf16.msra.mxu0 0
      %431 = vmatprep.subr.bf16.mxu0 0
      %432 = vmatpush2.bf16.msra.mxu0 0
      %433 = vmatprep.subr.bf16.mxu0 0
      %434 = vmatpush2.bf16.msra.mxu0 0
      %435 = vmatprep.subr.bf16.mxu0 0
      %436 = vmatpush2.bf16.msra.mxu0 0
      %437 = vmatprep.subr.bf16.mxu0 0
      %438 = vmatpush2.bf16.msra.mxu0 0
      %439 = vmatprep.subr.bf16.mxu0 0
      %440 = vmatpush2.bf16.msra.mxu0 0
      %441 = vmatprep.mubr.bf16.mxu0 0
      %442 = vmatmul.mubr.bf16.gmra.mxu0 %v404
      %v443 = vpop.f32.mrf.mxu0
      %v444 = vadd.f32 0.0, %v443
      %v445 = vpop.f32.mrf.mxu0
      %v446 = vpop.f32.mrf.mxu0
      %v447 = vpop.f32.mrf.mxu0
      %448 = vdwg.mxu0
      %449 = vrot.lane.b32.xlu0 %v114, 104
      %v450 = vpop.permute.xlu0 %449
      %451 = vrot.lane.b32.xlu0 %v114, 72
      %v452 = vpop.permute.xlu0 %451
      %v454 = vsel %vm118, %v450, 0
      %v457 = vsel %vm118, %v452, 0
      %459 = vmatprep.subr.bf16.mxu0 0
      %460 = vmatpush1.bf16.xpose.msra.mxu0 0
      %461 = vmatprep.subr.bf16.mxu0 0
      %462 = vmatpush1.bf16.xpose.msra.mxu0 0
      %463 = vmatprep.subr.bf16.mxu0 0
      %464 = vmatpush1.bf16.xpose.msra.mxu0 0
      %465 = vmatprep.subr.bf16.mxu0 0
      %466 = vmatpush1.bf16.xpose.msra.mxu0 0
      %467 = vmatprep.subr.bf16.mxu0 0
      %468 = vmatpush1.bf16.xpose.msra.mxu0 0
      %469 = vmatprep.subr.bf16.mxu0 0
      %470 = vmatpush1.bf16.xpose.msra.mxu0 0
      %471 = vmatprep.subr.bf16.mxu0 0
      %472 = vmatpush1.bf16.xpose.msra.mxu0 0
      %473 = vmatprep.subr.bf16.mxu0 0
      %474 = vmatpush1.bf16.xpose.msra.mxu0 %v457
      %475 = vmatprep.subr.bf16.mxu0 0
      %476 = vmatpush2.bf16.xpose.msra.mxu0 0
      %477 = vmatprep.subr.bf16.mxu0 0
      %478 = vmatpush2.bf16.xpose.msra.mxu0 0
      %479 = vmatprep.subr.bf16.mxu0 0
      %480 = vmatpush2.bf16.xpose.msra.mxu0 0
      %481 = vmatprep.subr.bf16.mxu0 0
      %482 = vmatpush2.bf16.xpose.msra.mxu0 0
      %483 = vmatprep.subr.bf16.mxu0 0
      %484 = vmatpush2.bf16.xpose.msra.mxu0 0
      %485 = vmatprep.subr.bf16.mxu0 0
      %486 = vmatpush2.bf16.xpose.msra.mxu0 0
      %487 = vmatprep.subr.bf16.mxu0 0
      %488 = vmatpush2.bf16.xpose.msra.mxu0 0
      %489 = vmatprep.subr.bf16.mxu0 0
      %490 = vmatpush2.bf16.xpose.msra.mxu0 0
      %491 = vmatprep.mubr.bf16.mxu0 0
      %492 = vmatmul.mubr.bf16.gmra.mxu0 %v454
      %v493 = vpop.f32.mrf.mxu0
      %v494 = vadd.f32 0.0, %v493
      %v495 = vpop.f32.mrf.mxu0
      %v496 = vpop.f32.mrf.mxu0
      %v497 = vpop.f32.mrf.mxu0
      %498 = vdwg.mxu0
      %v499 = vmul.f32 %v494, 0.35355338
      %v500 = vsel %vm118, %v499, -inf
      %501 = vmax.xlane.f32.xlu0 %v500
      %v502 = vpop.xlane.xlu0 %501
      %v503 = vsub.f32 %v499, %v502
      %v504 = vmul.f32 %v503, 1.442695
      %v505 = vpow.pop %v504
      %v506 = vsel %vm118, %v505, 0.0
      %507 = vadd.xlane.f32.xlu0 %v506
      %v508 = vpop.xlane.xlu0 %507
      %v509 = vrcp.pop %v508
      %v510 = vmul.f32 %v505, %v509
      %v511 = vpack.c.bf16 %v510, %v510
      %512 = vrot.lane.b32.xlu0 %v114, 40
      %v513 = vpop.permute.xlu0 %512
      %v515 = vsel %vm118, %v511, 0
      %v518 = vsel %vm183, %v513, 0
      %520 = vmatprep.subr.bf16.mxu0 0
      %521 = vmatpush1.bf16.msra.mxu0 0
      %522 = vmatprep.subr.bf16.mxu0 0
      %523 = vmatpush1.bf16.msra.mxu0 0
      %524 = vmatprep.subr.bf16.mxu0 0
      %525 = vmatpush1.bf16.msra.mxu0 0
      %526 = vmatprep.subr.bf16.mxu0 0
      %527 = vmatpush1.bf16.msra.mxu0 0
      %528 = vmatprep.subr.bf16.mxu0 0
      %529 = vmatpush1.bf16.msra.mxu0 0
      %530 = vmatprep.subr.bf16.mxu0 0
      %531 = vmatpush1.bf16.msra.mxu0 0
      %532 = vmatprep.subr.bf16.mxu0 0
      %533 = vmatpush1.bf16.msra.mxu0 0
      %534 = vmatprep.subr.bf16.mxu0 0
      %535 = vmatpush1.bf16.msra.mxu0 %v518
      %536 = vmatprep.subr.bf16.mxu0 0
      %537 = vmatpush2.bf16.msra.mxu0 0
      %538 = vmatprep.subr.bf16.mxu0 0
      %539 = vmatpush2.bf16.msra.mxu0 0
      %540 = vmatprep.subr.bf16.mxu0 0
      %541 = vmatpush2.bf16.msra.mxu0 0
      %542 = vmatprep.subr.bf16.mxu0 0
      %543 = vmatpush2.bf16.msra.mxu0 0
      %544 = vmatprep.subr.bf16.mxu0 0
      %545 = vmatpush2.bf16.msra.mxu0 0
      %546 = vmatprep.subr.bf16.mxu0 0
      %547 = vmatpush2.bf16.msra.mxu0 0
      %548 = vmatprep.subr.bf16.mxu0 0
      %549 = vmatpush2.bf16.msra.mxu0 0
      %550 = vmatprep.subr.bf16.mxu0 0
      %551 = vmatpush2.bf16.msra.mxu0 0
      %552 = vmatprep.mubr.bf16.mxu0 0
      %553 = vmatmul.mubr.bf16.gmra.mxu0 %v515
      %v554 = vpop.f32.mrf.mxu0
      %v555 = vadd.f32 0.0, %v554
      %v556 = vpop.f32.mrf.mxu0
      %v557 = vpop.f32.mrf.mxu0
      %v558 = vpop.f32.mrf.mxu0
      %559 = vdwg.mxu0
      %561 = vrot.lane.b32.xlu0 %v333, 8
      %v562 = vpop.permute.xlu0 %561
      %565 = vrot.lane.b32.xlu0 %v444, 16
      %v566 = vpop.permute.xlu0 %565
      %569 = vrot.lane.b32.xlu0 %v555, 24
      %v570 = vpop.permute.xlu0 %569
      %v572 = vsel %vm118, %v222, %v562
      %vm573 = vcmask 130048
      %v574 = vsel %vm573, %v572, %v566
      %vm575 = vcmask 195584
      %v576 = vsel %vm575, %v574, %v570
      %vm577 = vcmask 261120
      %578 = vst.msk [vmem:[%s111] sm:$0xff] %vm577, %v576
      %p579 = scmp.lt.s32.totalorder %s12, 1
      %s580 = scalar_select %p579, %s12, 1
      %s581 = smul.addr %s580, 8
      %s582 = scalar_lea.vmem %s1, %s581
      // Predicated region
      $region25: #{transformer_forward.12} parent=23 // pred_check
        %p583 = pneg %p56
      $region26: #{transformer_forward.12} parent=23 // pred_check_branch
        %585 = sbr.rel (%p583) target = $region28
      $region27: #{transformer_forward.12} parent=23 // pred_region
        _
      $region28: #{transformer_forward.12} parent=23 // pred_fallthru
        _
    $region24: #{transformer_forward.12} parent=5 // pred_fallthru
      _
    %p586 = scmp.le.s32.totalorder 2, %s7
    // Predicated region
    $region29: #{transformer_forward.12} parent=5 // pred_check
      %p587 = pneg %p586
    $region30: #{transformer_forward.12} parent=5 // pred_check_branch
      %589 = sbr.rel (%p587) target = $region32
    $region31: #{transformer_forward.12} parent=5 // pred_region
      %s590 = ssub.s32 %s7, 2
      // Predicated region
      $region33: #{transformer_forward.12} parent=31 // pred_check
        %p591 = pneg %p62
      $region34: #{transformer_forward.12} parent=31 // pred_check_branch
        %593 = sbr.rel (%p591) target = $region36
      $region35: #{transformer_forward.12} parent=31 // pred_region
        %p594 = scmp.lt.s32.totalorder %s13, 1
        %s595 = scalar_select %p594, %s13, 1
        %s596 = smul.addr %s595, 8
        %s597 = scalar_lea.vmem %s1, %s596
      $region36: #{transformer_forward.12} parent=31 // pred_fallthru
        _
    $region32: #{transformer_forward.12} parent=5 // pred_fallthru
      _
  $region6: #{transformer_forward.12} parent=0 // loop_footer
    %s11 = sadd.s32 1, %s7
  $region7: #{transformer_forward.12} parent=0 // loop_footer_branch
    %6 = sbr.rel target = $region3
  $region8: #{transformer_forward.12} parent=0 // loop_exit
    _

// kernel: transformer_forward.19
$region0: #{transformer_forward.19}
  #allocation0 [shape = 'u32[]', space=smem, size = 0x4, offset = 0x4, fixed_abs, tag = 'smem constant byte address 0x4 - core index']
  #allocation1 [shape = 'u32[144,128]{1,0:T(1,128)}', space=vmem, size = 0x12000, scoped, tag = 'internal scratch']
  %s0 = inlined_call_operand.vmem [shape: f32[2,32], index: 0, kind: input, shape index: {}]
  %s1 = inlined_call_operand.vmem [shape: bf16[32,128], index: 1, kind: input, shape index: {}]
  %s2 = inlined_call_operand.vmem [shape: f32[1,128], index: 2, kind: input, shape index: {}]
  %s3 = inlined_call_operand.vmem [shape: f32[2,128], index: 3, kind: output, shape index: {}]
  %s4 = sld [smem:[#allocation0]]
  $region22: #{transformer_forward.19} parent=0
    _
  %s6 = ssub.s32 1, %s4
  %s7 = scalar_select 0, %s6, %s4
  // Predicated region
  $region2: #{transformer_forward.19} parent=0 // pred_check
    _
  $region3: #{transformer_forward.19} parent=0 // pred_check_branch
    %9 = sbr.rel (0) target = $region5
  $region4: #{transformer_forward.19} parent=0 // pred_region
    _
  $region5: #{transformer_forward.19} parent=0 // pred_fallthru
    _
  // Predicated region
  $region6: #{transformer_forward.19} parent=0 // pred_check
    _
  $region7: #{transformer_forward.19} parent=0 // pred_check_branch
    %11 = sbr.rel (0) target = $region9
  $region8: #{transformer_forward.19} parent=0 // pred_region
    _
  $region9: #{transformer_forward.19} parent=0 // pred_fallthru
    _
  // Predicated region
  $region10: #{transformer_forward.19} parent=0 // pred_check
    _
  $region11: #{transformer_forward.19} parent=0 // pred_check_branch
    %13 = sbr.rel (0) target = $region13
  $region12: #{transformer_forward.19} parent=0 // pred_region
    _
  $region13: #{transformer_forward.19} parent=0 // pred_fallthru
    _
  %v15 = vld [vmem:[%s0] sm:$0x3]
  %v16 = vpack.c.bf16 %v15, %v15
  %v17 = vld [vmem:[%s1] sm:$0xf]
  %v18 = vld [vmem:[%s1 + $0x4] sm:$0xf]
  %v19 = vld [vmem:[%s1 + $0x8] sm:$0xf]
  %v20 = vld [vmem:[%s1 + $0xc] sm:$0xf]
  %v21 = vld [vmem:[%s2] sm:$0x1]
  %v23 = vlaneseq
  %v24 = vshrl.u32 %v23, 7
  %v25 = vsub.s32 0, %v24
  %v26 = vrot.slane %v21, %v25
  %v32 = vunpack.c.l.b16 %v17
  %v33 = vunpack.c.l.b16 %v18
  %v34 = vunpack.c.l.b16 %v19
  %v35 = vunpack.c.l.b16 %v20
  %v36 = vpack.c.b16 %v33, %v32
  %v37 = vpack.c.b16 %v35, %v34
  %vm40 = vcmask 261120
  %v42 = vsel %vm40, %v16, 0
  %44 = vmatprep.subr.bf16.mxu0 0
  %45 = vmatpush1.bf16.msra.mxu0 0
  %46 = vmatprep.subr.bf16.mxu0 0
  %47 = vmatpush1.bf16.msra.mxu0 0
  %48 = vmatprep.subr.bf16.mxu0 0
  %49 = vmatpush1.bf16.msra.mxu0 0
  %50 = vmatprep.subr.bf16.mxu0 0
  %51 = vmatpush1.bf16.msra.mxu0 0
  %52 = vmatprep.subr.bf16.mxu0 0
  %53 = vmatpush1.bf16.msra.mxu0 0
  %54 = vmatprep.subr.bf16.mxu0 0
  %55 = vmatpush1.bf16.msra.mxu0 0
  %56 = vmatprep.subr.bf16.mxu0 0
  %57 = vmatpush1.bf16.msra.mxu0 %v37
  %58 = vmatprep.subr.bf16.mxu0 0
  %59 = vmatpush1.bf16.msra.mxu0 %v36
  %60 = vmatprep.subr.bf16.mxu0 0
  %61 = vmatpush2.bf16.msra.mxu0 0
  %62 = vmatprep.subr.bf16.mxu0 0
  %63 = vmatpush2.bf16.msra.mxu0 0
  %64 = vmatprep.subr.bf16.mxu0 0
  %65 = vmatpush2.bf16.msra.mxu0 0
  %66 = vmatprep.subr.bf16.mxu0 0
  %67 = vmatpush2.bf16.msra.mxu0 0
  %68 = vmatprep.subr.bf16.mxu0 0
  %69 = vmatpush2.bf16.msra.mxu0 0
  %70 = vmatprep.subr.bf16.mxu0 0
  %71 = vmatpush2.bf16.msra.mxu0 0
  %72 = vmatprep.subr.bf16.mxu0 0
  %73 = vmatpush2.bf16.msra.mxu0 0
  %74 = vmatprep.subr.bf16.mxu0 0
  %75 = vmatpush2.bf16.msra.mxu0 0
  %76 = vmatprep.mubr.bf16.mxu0 0
  %77 = vmatmul.mubr.bf16.gmra.mxu0 %v42
  %v78 = vpop.f32.mrf.mxu0
  %v79 = vadd.f32 %v26, %v78
  %v80 = vpop.f32.mrf.mxu0
  %v81 = vpop.f32.mrf.mxu0
  %v82 = vpop.f32.mrf.mxu0
  %83 = vdwg.mxu0
  %84 = vst [vmem:[%s3] sm:$0x3] %v79
  // Predicated region
  $region14: #{transformer_forward.19} parent=0 // pred_check
    _
  $region15: #{transformer_forward.19} parent=0 // pred_check_branch
    %86 = sbr.rel (0) target = $region17
  $region16: #{transformer_forward.19} parent=0 // pred_region
    _
  $region17: #{transformer_forward.19} parent=0 // pred_fallthru
    _
  // Predicated region
  $region18: #{transformer_forward.19} parent=0 // pred_check
    _
  $region19: #{transformer_forward.19} parent=0 // pred_check_branch
    %88 = sbr.rel (0) target = $region21
  $region20: #{transformer_forward.19} parent=0 // pred_region
    _
  $region21: #{transformer_forward.19} parent=0 // pred_fallthru
    _

// kernel: transformer_forward.14
$region0: #{transformer_forward.14}
  #allocation0 [shape = 'u32[]', space=smem, size = 0x4, offset = 0x4, fixed_abs, tag = 'smem constant byte address 0x4 - core index']
  #allocation1 [shape = 'u32[144,128]{1,0:T(1,128)}', space=vmem, size = 0x12000, scoped, tag = 'internal scratch']
  %s0 = inlined_call_operand.vmem [shape: f32[16,32], index: 0, kind: input, shape index: {}]
  %s1 = inlined_call_operand.vmem [shape: bf16[32,64], index: 1, kind: input, shape index: {}]
  %s2 = inlined_call_operand.vmem [shape: f32[1,64], index: 2, kind: input, shape index: {}]
  %s3 = inlined_call_operand.vmem [shape: bf16[64,32], index: 3, kind: input, shape index: {}]
  %s4 = inlined_call_operand.vmem [shape: f32[1,32], index: 4, kind: input, shape index: {}]
  %s5 = inlined_call_operand.vmem [shape: f32[1,32], index: 5, kind: input, shape index: {}]
  %s6 = inlined_call_operand.vmem [shape: f32[1,32], index: 6, kind: input, shape index: {}]
  %s7 = inlined_call_operand.vmem [shape: f32[16,32], index: 7, kind: output, shape index: {}]
  %s8 = sld [smem:[#allocation0]]
  $region38: #{transformer_forward.14} parent=0
    _
  %s10 = ssub.s32 1, %s8
  %s11 = scalar_select 0, %s10, %s8
  // Predicated region
  $region2: #{transformer_forward.14} parent=0 // pred_check
    _
  $region3: #{transformer_forward.14} parent=0 // pred_check_branch
    %13 = sbr.rel (0) target = $region5
  $region4: #{transformer_forward.14} parent=0 // pred_region
    _
  $region5: #{transformer_forward.14} parent=0 // pred_fallthru
    _
  // Predicated region
  $region6: #{transformer_forward.14} parent=0 // pred_check
    _
  $region7: #{transformer_forward.14} parent=0 // pred_check_branch
    %15 = sbr.rel (0) target = $region9
  $region8: #{transformer_forward.14} parent=0 // pred_region
    _
  $region9: #{transformer_forward.14} parent=0 // pred_fallthru
    _
  // Predicated region
  $region10: #{transformer_forward.14} parent=0 // pred_check
    _
  $region11: #{transformer_forward.14} parent=0 // pred_check_branch
    %17 = sbr.rel (0) target = $region13
  $region12: #{transformer_forward.14} parent=0 // pred_region
    _
  $region13: #{transformer_forward.14} parent=0 // pred_fallthru
    _
  // Predicated region
  $region14: #{transformer_forward.14} parent=0 // pred_check
    _
  $region15: #{transformer_forward.14} parent=0 // pred_check_branch
    %19 = sbr.rel (0) target = $region17
  $region16: #{transformer_forward.14} parent=0 // pred_region
    _
  $region17: #{transformer_forward.14} parent=0 // pred_fallthru
    _
  // Predicated region
  $region18: #{transformer_forward.14} parent=0 // pred_check
    _
  $region19: #{transformer_forward.14} parent=0 // pred_check_branch
    %21 = sbr.rel (0) target = $region21
  $region20: #{transformer_forward.14} parent=0 // pred_region
    _
  $region21: #{transformer_forward.14} parent=0 // pred_fallthru
    _
  // Predicated region
  $region22: #{transformer_forward.14} parent=0 // pred_check
    _
  $region23: #{transformer_forward.14} parent=0 // pred_check_branch
    %23 = sbr.rel (0) target = $region25
  $region24: #{transformer_forward.14} parent=0 // pred_region
    _
  $region25: #{transformer_forward.14} parent=0 // pred_fallthru
    _
  // Predicated region
  $region26: #{transformer_forward.14} parent=0 // pred_check
    _
  $region27: #{transformer_forward.14} parent=0 // pred_check_branch
    %25 = sbr.rel (0) target = $region29
  $region28: #{transformer_forward.14} parent=0 // pred_region
    _
  $region29: #{transformer_forward.14} parent=0 // pred_fallthru
    _
  %v27 = vld [vmem:[%s0] sm:$0xff]
  %v28 = vld [vmem:[%s0 + $0x8] sm:$0xff]
  %v29 = vpack.c.bf16 %v28, %v27
  %v30 = vld [vmem:[%s1] sm:$0xf]
  %v31 = vld [vmem:[%s1 + $0x4] sm:$0xf]
  %v32 = vld [vmem:[%s1 + $0x8] sm:$0xf]
  %v33 = vld [vmem:[%s1 + $0xc] sm:$0xf]
  %v34 = vld [vmem:[%s2] sm:$0x1]
  %v36 = vlaneseq
  %v37 = vshrl.u32 %v36, 7
  %v38 = vsub.s32 0, %v37
  %v39 = vrot.slane %v34, %v38
  %v45 = vunpack.c.l.b16 %v30
  %v46 = vunpack.c.l.b16 %v31
  %v47 = vunpack.c.l.b16 %v32
  %v48 = vunpack.c.l.b16 %v33
  %v49 = vpack.c.b16 %v46, %v45
  %v50 = vpack.c.b16 %v48, %v47
  %vm53 = vcmask 261120
  %v55 = vsel %vm53, %v29, 0
  %57 = vmatprep.subr.bf16.mxu0 0
  %58 = vmatpush1.bf16.msra.mxu0 0
  %59 = vmatprep.subr.bf16.mxu0 0
  %60 = vmatpush1.bf16.msra.mxu0 0
  %61 = vmatprep.subr.bf16.mxu0 0
  %62 = vmatpush1.bf16.msra.mxu0 0
  %63 = vmatprep.subr.bf16.mxu0 0
  %64 = vmatpush1.bf16.msra.mxu0 0
  %65 = vmatprep.subr.bf16.mxu0 0
  %66 = vmatpush1.bf16.msra.mxu0 0
  %67 = vmatprep.subr.bf16.mxu0 0
  %68 = vmatpush1.bf16.msra.mxu0 0
  %69 = vmatprep.subr.bf16.mxu0 0
  %70 = vmatpush1.bf16.msra.mxu0 %v50
  %71 = vmatprep.subr.bf16.mxu0 0
  %72 = vmatpush1.bf16.msra.mxu0 %v49
  %73 = vmatprep.subr.bf16.mxu0 0
  %74 = vmatpush2.bf16.msra.mxu0 0
  %75 = vmatprep.subr.bf16.mxu0 0
  %76 = vmatpush2.bf16.msra.mxu0 0
  %77 = vmatprep.subr.bf16.mxu0 0
  %78 = vmatpush2.bf16.msra.mxu0 0
  %79 = vmatprep.subr.bf16.mxu0 0
  %80 = vmatpush2.bf16.msra.mxu0 0
  %81 = vmatprep.subr.bf16.mxu0 0
  %82 = vmatpush2.bf16.msra.mxu0 0
  %83 = vmatprep.subr.bf16.mxu0 0
  %84 = vmatpush2.bf16.msra.mxu0 0
  %85 = vmatprep.subr.bf16.mxu0 0
  %86 = vmatpush2.bf16.msra.mxu0 0
  %87 = vmatprep.subr.bf16.mxu0 0
  %88 = vmatpush2.bf16.msra.mxu0 0
  %89 = vmatprep.mubr.bf16.mxu0 0
  %90 = vmatmul.mubr.bf16.gmra.mxu0 %v55
  %v91 = vpop.f32.mrf.mxu0
  %v92 = vadd.f32 %v39, %v91
  %v93 = vpop.f32.mrf.mxu0
  %v94 = vpop.f32.mrf.mxu0
  %v95 = vadd.f32 %v39, %v94
  %v96 = vpop.f32.mrf.mxu0
  %97 = vdwg.mxu0
  %v98 = vmax.f32 %v92, 0.0
  %v99 = vmax.f32 %v95, 0.0
  %v100 = vpack.c.bf16 %v99, %v98
  %v101 = vld [vmem:[%s3] sm:$0xf]
  %v102 = vld [vmem:[%s3 + $0x4] sm:$0xf]
  %v103 = vld [vmem:[%s3 + $0x8] sm:$0xf]
  %v104 = vld [vmem:[%s3 + $0xc] sm:$0xf]
  %v105 = vld [vmem:[%s3 + $0x10] sm:$0xf]
  %v106 = vld [vmem:[%s3 + $0x14] sm:$0xf]
  %v107 = vld [vmem:[%s3 + $0x18] sm:$0xf]
  %v108 = vld [vmem:[%s3 + $0x1c] sm:$0xf]
  %v109 = vld [vmem:[%s4] sm:$0x1]
  %v111 = vlaneseq
  %v112 = vshrl.u32 %v111, 7
  %v113 = vsub.s32 0, %v112
  %v114 = vrot.slane %v109, %v113
  %v124 = vunpack.c.l.b16 %v101
  %v125 = vunpack.c.l.b16 %v102
  %v126 = vunpack.c.l.b16 %v103
  %v127 = vunpack.c.l.b16 %v104
  %v128 = vunpack.c.l.b16 %v105
  %v129 = vunpack.c.l.b16 %v106
  %v130 = vunpack.c.l.b16 %v107
  %v131 = vunpack.c.l.b16 %v108
  %v132 = vpack.c.b16 %v125, %v124
  %v133 = vpack.c.b16 %v127, %v126
  %v134 = vpack.c.b16 %v129, %v128
  %v135 = vpack.c.b16 %v131, %v130
  %vm140 = vcmask 523264
  %v142 = vsel %vm140, %v100, 0
  %144 = vmatprep.subr.bf16.mxu0 0
  %145 = vmatpush1.bf16.msra.mxu0 0
  %146 = vmatprep.subr.bf16.mxu0 0
  %147 = vmatpush1.bf16.msra.mxu0 0
  %148 = vmatprep.subr.bf16.mxu0 0
  %149 = vmatpush1.bf16.msra.mxu0 0
  %150 = vmatprep.subr.bf16.mxu0 0
  %151 = vmatpush1.bf16.msra.mxu0 0
  %152 = vmatprep.subr.bf16.mxu0 0
  %153 = vmatpush1.bf16.msra.mxu0 %v135
  %154 = vmatprep.subr.bf16.mxu0 0
  %155 = vmatpush1.bf16.msra.mxu0 %v134
  %156 = vmatprep.subr.bf16.mxu0 0
  %157 = vmatpush1.bf16.msra.mxu0 %v133
  %158 = vmatprep.subr.bf16.mxu0 0
  %159 = vmatpush1.bf16.msra.mxu0 %v132
  %160 = vmatprep.subr.bf16.mxu0 0
  %161 = vmatpush2.bf16.msra.mxu0 0
  %162 = vmatprep.subr.bf16.mxu0 0
  %163 = vmatpush2.bf16.msra.mxu0 0
  %164 = vmatprep.subr.bf16.mxu0 0
  %165 = vmatpush2.bf16.msra.mxu0 0
  %166 = vmatprep.subr.bf16.mxu0 0
  %167 = vmatpush2.bf16.msra.mxu0 0
  %168 = vmatprep.subr.bf16.mxu0 0
  %169 = vmatpush2.bf16.msra.mxu0 0
  %170 = vmatprep.subr.bf16.mxu0 0
  %171 = vmatpush2.bf16.msra.mxu0 0
  %172 = vmatprep.subr.bf16.mxu0 0
  %173 = vmatpush2.bf16.msra.mxu0 0
  %174 = vmatprep.subr.bf16.mxu0 0
  %175 = vmatpush2.bf16.msra.mxu0 0
  %176 = vmatprep.mubr.bf16.mxu0 0
  %177 = vmatmul.mubr.bf16.gmra.mxu0 %v142
  %v178 = vpop.f32.mrf.mxu0
  %v179 = vadd.f32 %v114, %v178
  %v180 = vpop.f32.mrf.mxu0
  %v181 = vpop.f32.mrf.mxu0
  %v182 = vadd.f32 %v114, %v181
  %v183 = vpop.f32.mrf.mxu0
  %184 = vdwg.mxu0
  %v185 = vadd.f32 %v179, %v27
  %v186 = vadd.f32 %v182, %v28
  %v187 = vsel %vm53, %v185, 0.0
  %188 = vadd.xlane.f32.xlu0 %v187
  %v189 = vpop.xlane.xlu0 %188
  %v190 = vsel %vm53, %v186, 0.0
  %191 = vadd.xlane.f32.xlu0 %v190
  %v192 = vpop.xlane.xlu0 %191
  %v193 = vrcp.pop 32.0
  %v194 = vmul.f32 %v189, %v193
  %v195 = vmul.f32 %v192, %v193
  %v196 = vsub.f32 %v185, %v194
  %v197 = vsub.f32 %v186, %v195
  %v198 = vmul.f32 %v196, %v196
  %v199 = vmul.f32 %v197, %v197
  %v200 = vsel %vm53, %v198, 0.0
  %201 = vadd.xlane.f32.xlu0 %v200
  %v202 = vpop.xlane.xlu0 %201
  %v203 = vsel %vm53, %v199, 0.0
  %204 = vadd.xlane.f32.xlu0 %v203
  %v205 = vpop.xlane.xlu0 %204
  %v206 = vmul.f32 %v202, %v193
  %v207 = vmul.f32 %v205, %v193
  %v208 = vadd.f32 %v206, 1e-05
  %v209 = vadd.f32 %v207, 1e-05
  %v210 = vrsqrt.pop %v208
  %v211 = vrsqrt.pop %v209
  %v212 = vmul.f32 %v196, %v210
  %v213 = vmul.f32 %v197, %v211
  %v214 = vld [vmem:[%s5] sm:$0x1]
  %v216 = vlaneseq
  %v217 = vshrl.u32 %v216, 7
  %v218 = vsub.s32 0, %v217
  %v219 = vrot.slane %v214, %v218
  %v221 = vmul.f32 %v212, %v219
  %v222 = vmul.f32 %v213, %v219
  %v223 = vld [vmem:[%s6] sm:$0x1]
  %v225 = vlaneseq
  %v226 = vshrl.u32 %v225, 7
  %v227 = vsub.s32 0, %v226
  %v228 = vrot.slane %v223, %v227
  %v230 = vadd.f32 %v221, %v228
  %v231 = vadd.f32 %v222, %v228
  %232 = vst.msk [vmem:[%s7] sm:$0xff] %vm53, %v230
  %233 = vst.msk [vmem:[%s7 + $0x8] sm:$0xff] %vm53, %v231
  // Predicated region
  $region30: #{transformer_forward.14} parent=0 // pred_check
    _
  $region31: #{transformer_forward.14} parent=0 // pred_check_branch
    %235 = sbr.rel (0) target = $region33
  $region32: #{transformer_forward.14} parent=0 // pred_region
    _
  $region33: #{transformer_forward.14} parent=0 // pred_fallthru
    _
  // Predicated region
  $region34: #{transformer_forward.14} parent=0 // pred_check
    _
  $region35: #{transformer_forward.14} parent=0 // pred_check_branch
    %237 = sbr.rel (0) target = $region37
  $region36: #{transformer_forward.14} parent=0 // pred_region
    _
  $region37: #{transformer_forward.14} parent=0 // pred_fallthru
    _

</llo_original>
